<compile_context>
chip_gen: v5e
topology: v5e:2x2
jax: 0.10.0
libtpu: 0.0.40
codegen_flags: <defaults>
</compile_context>

<pallas_src>
import functools
import numpy as np
import jax
import jax.numpy as jnp
from jax.experimental import pallas as pl
from jax.experimental.pallas import tpu as pltpu

SQRT_HALF = 0.7071067811865476


def _gelu(v):
    # exact (erf-based) GELU, matching torch.nn.GELU() default
    return 0.5 * v * (1.0 + jax.lax.erf(v * SQRT_HALF))


def _qflow_kernel(conditional, *refs):
    """One ConditionalQFlowMLP forward over a (tb, x_dim) batch tile.

    `conditional` is a Python bool (closed over via functools.partial), so the
    unconditional path contains no y-embedding code at all.
    """
    f32 = jnp.float32
    if conditional:
        (x_ref, t_ref, harm_ref, y_ref,
         wy1_ref, by1_ref, wy2_ref, by2_ref,
         w1x_ref, w1t_ref, w1y_ref, b1_ref,
         w2_ref, b2_ref,
         w3_ref, b3_ref, g_ref, beta_ref,
         w4_ref, b4_ref,
         o_ref) = refs
    else:
        (x_ref, t_ref, harm_ref,
         w1x_ref, w1t_ref, b1_ref,
         w2_ref, b2_ref,
         w3_ref, b3_ref, g_ref, beta_ref,
         w4_ref, b4_ref,
         o_ref) = refs

    def mm(a, w_ref):
        # Match the activation dtype to the (possibly bf16) weight dtype so the
        # MXU sees a homogeneous bf16 (or f32) matmul; accumulate in f32.
        w = w_ref[...]
        return jnp.dot(a.astype(w.dtype), w, preferred_element_type=f32)

    # --- Fourier time embedding, fused [sin | cos] -> one (tb,128) MXU operand ---
    th = t_ref[...] * harm_ref[...]                        # (tb,1)*(1,64) -> (tb,64)
    t_emb = jnp.concatenate([jnp.sin(th), jnp.cos(th)], axis=-1)   # (tb,128)

    # --- x_model first linear: cat([x, t_emb, y_emb], 1) @ W1 as split matmuls ---
    h1 = mm(x_ref[...], w1x_ref) + mm(t_emb, w1t_ref) + b1_ref[...]
    if conditional:
        # y_embedding: Linear(y_dim,128) -> GELU -> Linear(128,128)
        hy = _gelu(mm(y_ref[...], wy1_ref) + by1_ref[...])
        y_emb = mm(hy, wy2_ref) + by2_ref[...]
        h1 = h1 + mm(y_emb, w1y_ref)
    # TODO(synk): use_dropout=True path (random masking of y_emb rows) not implemented.

    h1 = _gelu(h1)
    h2 = _gelu(mm(h1, w2_ref) + b2_ref[...])

    # --- out_model: Linear -> LayerNorm -> GELU -> Linear ---
    h3 = mm(h2, w3_ref) + b3_ref[...]
    mu = jnp.mean(h3, axis=-1, keepdims=True)
    ex2 = jnp.mean(h3 * h3, axis=-1, keepdims=True)
    var = ex2 - mu * mu                                    # single-pass stats
    hn = (h3 - mu) * jax.lax.rsqrt(var + 1e-5) * g_ref[...] + beta_ref[...]
    h4 = _gelu(hn)
    o_ref[...] = mm(h4, w4_ref) + b4_ref[...]


def qflow_forward(params, x, t, y=None, *, force_unconditional=False,
                  compute_dtype=jnp.float32, tb=None):
    """Pallas forward for one ConditionalQFlowMLP (one ensemble member).

    compute_dtype: dtype of the MXU matmul operands (weights + activations);
    biases, LayerNorm params and all VPU/EUP math stay f32.
    """
    B, xd = x.shape
    conditional = not force_unconditional
    if tb is None:
        tb = B if B <= 128 else 128            # one grid step for small batches
    t2 = t.reshape(B, 1).astype(jnp.float32)
    harm = params["harmonics"].reshape(1, 64).astype(jnp.float32)

    cd = compute_dtype

    def w(name):
        return params[name].astype(cd)

    # data inputs (batch-tiled) then weight/bias inputs (whole-array blocks)
    data_ins = [x.astype(jnp.float32), t2, harm]
    data_specs = [pl.BlockSpec((tb, xd), lambda i: (i, 0)),
                  pl.BlockSpec((tb, 1), lambda i: (i, 0)),
                  pl.BlockSpec(harm.shape, lambda i: (0, 0))]

    if conditional:
        yd = y.shape[1]
        data_ins.append(y.astype(jnp.float32))
        data_specs.append(pl.BlockSpec((tb, yd), lambda i: (i, 0)))
        weight_ins = [w("wy1"), params["by1"], w("wy2"), params["by2"],
                      w("w1x"), w("w1t"), w("w1y"), params["b1"]]
    else:
        weight_ins = [w("w1x"), w("w1t"), params["b1"]]
    weight_ins += [w("w2"), params["b2"],
                   w("w3"), params["b3"], params["ln_g"], params["ln_b"],
                   w("w4"), params["b4"]]
    weight_specs = [pl.BlockSpec(a.shape, lambda i: (0, 0)) for a in weight_ins]

    kern = functools.partial(_qflow_kernel, conditional)
    # TODO(synk): the sample() loop could fuse all diffusion timesteps (and both
    # cond/uncond passes) into one pallas_call with weights resident in VMEM.
    return pl.pallas_call(
        kern,
        out_shape=jax.ShapeDtypeStruct((B, xd), jnp.float32),
        grid=(pl.cdiv(B, tb),),
        in_specs=data_specs + weight_specs,
        out_specs=pl.BlockSpec((tb, xd), lambda i: (i, 0)),
        compiler_params=pltpu.CompilerParams(dimension_semantics=("parallel",)),
    )(*data_ins, *weight_ins)


# ----------------------------- pure-JAX reference -----------------------------
def qflow_reference(params, x, t, y, force_unconditional=False):
    harm = params["harmonics"]
    th = t[:, None] * harm[None, :]
    t_emb = jnp.concatenate([jnp.sin(th), jnp.cos(th)], axis=1)
    h = _gelu(y @ params["wy1"] + params["by1"])
    y_emb = h @ params["wy2"] + params["by2"]
    if force_unconditional:
        y_emb = y_emb * 0.0
    w1 = jnp.concatenate([params["w1x"], params["w1t"], params["w1y"]], axis=0)
    inp = jnp.concatenate([x, t_emb, y_emb], axis=1)
    h1 = _gelu(inp @ w1 + params["b1"])
    h2 = _gelu(h1 @ params["w2"] + params["b2"])
    h3 = h2 @ params["w3"] + params["b3"]
    mu = h3.mean(-1, keepdims=True)
    var = ((h3 - mu) ** 2).mean(-1, keepdims=True)
    hn = (h3 - mu) * jax.lax.rsqrt(var + 1e-5) * params["ln_g"] + params["ln_b"]
    return _gelu(hn) @ params["w4"] + params["b4"]


# ----------------------------- parameter init ---------------------------------
def _init_linear(key, in_f, out_f):
    k1, k2 = jax.random.split(key)
    bound = 1.0 / np.sqrt(in_f)
    wgt = jax.random.uniform(k1, (in_f, out_f), jnp.float32, -bound, bound)
    b = jax.random.uniform(k2, (1, out_f), jnp.float32, -bound, bound)
    return wgt, b


def init_policy_params(key, x_dim, hidden_dim, y_dim):
    keys = jax.random.split(key, 6)
    wy1, by1 = _init_linear(keys[0], y_dim, 128)
    wy2, by2 = _init_linear(keys[1], 128, 128)
    w1, b1 = _init_linear(keys[2], x_dim + 256, hidden_dim)
    w2, b2 = _init_linear(keys[3], hidden_dim, hidden_dim)
    w3, b3 = _init_linear(keys[4], hidden_dim, hidden_dim)
    w4, b4 = _init_linear(keys[5], hidden_dim, x_dim)
    # note: means_scaling_model params are unused in forward(), so not materialized here.
    return dict(
        wy1=wy1, by1=by1, wy2=wy2, by2=by2,
        w1x=w1[:x_dim], w1t=w1[x_dim:x_dim + 128], w1y=w1[x_dim + 128:], b1=b1,
        w2=w2, b2=b2, w3=w3, b3=b3,
        ln_g=jnp.ones((1, hidden_dim), jnp.float32),
        ln_b=jnp.zeros((1, hidden_dim), jnp.float32),
        w4=w4, b4=b4,
        harmonics=jnp.arange(1, 65, dtype=jnp.float32) * 2.0 * np.pi,
    )


def make_diffusion_buffers(diffusion_steps, dtype=jnp.float32):
    # mirrors the __init__ schedule math (not used by forward(), kept for fidelity)
    beta1, beta2 = 0.02, 0.0001
    beta_t = (beta1 - beta2) * jnp.arange(diffusion_steps + 1, 0, -1, dtype=dtype) / diffusion_steps + beta2
    alpha_t = 1.0 - jnp.flip(beta_t, axis=0)
    log_alpha_t = jnp.log(alpha_t)
    alphabar_t = jnp.exp(jnp.cumsum(log_alpha_t))
    return dict(beta_t=beta_t, alpha_t=jnp.flip(alpha_t, 0),
                alphabar_t=jnp.flip(alphabar_t, 0),
                sqrtab=jnp.flip(jnp.sqrt(alphabar_t), 0),
                oneover_sqrta=jnp.flip(1.0 / jnp.sqrt(alpha_t), 0),
                sqrtmab=jnp.flip(jnp.sqrt(1.0 - alphabar_t), 0),
                mab_over_sqrtmab_inv=jnp.flip((1.0 - alpha_t) / jnp.sqrt(1.0 - alphabar_t), 0))


if __name__ == "__main__":
    # ConditionalDiffusionModelEns config (small, synthetic)
    x_dim, hidden_dim, y_dim = 16, 128, 1
    num_ensembles, diffusion_steps = 5, 10
    B = 16
    idx = 2  # ensemble member selected by forward(..., idx)

    key = jax.random.PRNGKey(0)
    k_x, k_t, k_y, k_p = jax.random.split(key, 4)

    # per-ensemble parameters; forward() selects member `idx` (glue, plain JAX)
    ens_params = [init_policy_params(jax.random.fold_in(k_p, e), x_dim, hidden_dim, y_dim)
                  for e in range(num_ensembles)]
    _ = make_diffusion_buffers(diffusion_steps)  # schedule buffers (unused by forward)

    x = jax.random.normal(k_x, (B, x_dim), jnp.float32)
    t = jax.random.uniform(k_t, (B,), jnp.float32)       # diffusion time in [0,1)
    y = jax.random.normal(k_y, (B, y_dim), jnp.float32)

    params = ens_params[idx]

    # f32 path (conditional + unconditional)
    out = jax.block_until_ready(qflow_forward(params, x, t, y, force_unconditional=False))
    out_uncond = jax.block_until_ready(qflow_forward(params, x, t, y=None, force_unconditional=True))
    # bf16 MXU-operand path (v6e/v7x fast path; f32 accumulation + f32 VPU math)
    out_bf16 = jax.block_until_ready(
        qflow_forward(params, x, t, y, force_unconditional=False, compute_dtype=jnp.bfloat16))

    ref = qflow_reference(params, x, t, y, force_unconditional=False)
    ref_uncond = qflow_reference(params, x, t, y, force_unconditional=True)

    assert out.shape == (B, x_dim) and out.dtype == jnp.float32
    np.testing.assert_allclose(np.asarray(out), np.asarray(ref), rtol=2e-5, atol=2e-5)
    np.testing.assert_allclose(np.asarray(out_uncond), np.asarray(ref_uncond), rtol=2e-5, atol=2e-5)
    np.testing.assert_allclose(np.asarray(out_bf16), np.asarray(ref), rtol=5e-2, atol=5e-2)
    print("KERNEL_OK")
</pallas_src>

<mosaic_0001>
module attributes {stable_mosaic.version = 11 : i64} {
  func.func @_qflow_kernel(%arg0: i32, %arg1: memref<16x16xf32, #tpu.memory_space<vmem>>, %arg2: memref<16x1xf32, #tpu.memory_space<vmem>>, %arg3: memref<1x64xf32, #tpu.memory_space<vmem>>, %arg4: memref<16x1xf32, #tpu.memory_space<vmem>>, %arg5: memref<1x128xf32, #tpu.memory_space<vmem>>, %arg6: memref<1x128xf32, #tpu.memory_space<vmem>>, %arg7: memref<128x128xf32, #tpu.memory_space<vmem>>, %arg8: memref<1x128xf32, #tpu.memory_space<vmem>>, %arg9: memref<16x128xf32, #tpu.memory_space<vmem>>, %arg10: memref<128x128xf32, #tpu.memory_space<vmem>>, %arg11: memref<128x128xf32, #tpu.memory_space<vmem>>, %arg12: memref<1x128xf32, #tpu.memory_space<vmem>>, %arg13: memref<128x128xf32, #tpu.memory_space<vmem>>, %arg14: memref<1x128xf32, #tpu.memory_space<vmem>>, %arg15: memref<128x128xf32, #tpu.memory_space<vmem>>, %arg16: memref<1x128xf32, #tpu.memory_space<vmem>>, %arg17: memref<1x128xf32, #tpu.memory_space<vmem>>, %arg18: memref<1x128xf32, #tpu.memory_space<vmem>>, %arg19: memref<128x16xf32, #tpu.memory_space<vmem>>, %arg20: memref<1x16xf32, #tpu.memory_space<vmem>>, %arg21: memref<16x16xf32, #tpu.memory_space<vmem>>) attributes {dimension_semantics = [#tpu.dimension_semantics<parallel>], iteration_bounds = array<i64: 1>, scalar_prefetch = 0 : i64, scratch_operands = 0 : i64, tpu.core_type = #tpu.core_type<tc>, window_params = [{transform_indices = @transform_0, window_bounds = array<i64: 16, 16>}, {transform_indices = @transform_1, window_bounds = array<i64: 16, 1>}, {pipeline_mode = #tpu.pipeline_mode<synchronous>, transform_indices = @transform_2, window_bounds = array<i64: 1, 64>}, {transform_indices = @transform_3, window_bounds = array<i64: 16, 1>}, {pipeline_mode = #tpu.pipeline_mode<synchronous>, transform_indices = @transform_4, window_bounds = array<i64: 1, 128>}, {pipeline_mode = #tpu.pipeline_mode<synchronous>, transform_indices = @transform_5, window_bounds = array<i64: 1, 128>}, {pipeline_mode = #tpu.pipeline_mode<synchronous>, transform_indices = @transform_6, window_bounds = array<i64: 128, 128>}, {pipeline_mode = #tpu.pipeline_mode<synchronous>, transform_indices = @transform_7, window_bounds = array<i64: 1, 128>}, {pipeline_mode = #tpu.pipeline_mode<synchronous>, transform_indices = @transform_8, window_bounds = array<i64: 16, 128>}, {pipeline_mode = #tpu.pipeline_mode<synchronous>, transform_indices = @transform_9, window_bounds = array<i64: 128, 128>}, {pipeline_mode = #tpu.pipeline_mode<synchronous>, transform_indices = @transform_10, window_bounds = array<i64: 128, 128>}, {pipeline_mode = #tpu.pipeline_mode<synchronous>, transform_indices = @transform_11, window_bounds = array<i64: 1, 128>}, {pipeline_mode = #tpu.pipeline_mode<synchronous>, transform_indices = @transform_12, window_bounds = array<i64: 128, 128>}, {pipeline_mode = #tpu.pipeline_mode<synchronous>, transform_indices = @transform_13, window_bounds = array<i64: 1, 128>}, {pipeline_mode = #tpu.pipeline_mode<synchronous>, transform_indices = @transform_14, window_bounds = array<i64: 128, 128>}, {pipeline_mode = #tpu.pipeline_mode<synchronous>, transform_indices = @transform_15, window_bounds = array<i64: 1, 128>}, {pipeline_mode = #tpu.pipeline_mode<synchronous>, transform_indices = @transform_16, window_bounds = array<i64: 1, 128>}, {pipeline_mode = #tpu.pipeline_mode<synchronous>, transform_indices = @transform_17, window_bounds = array<i64: 1, 128>}, {pipeline_mode = #tpu.pipeline_mode<synchronous>, transform_indices = @transform_18, window_bounds = array<i64: 128, 16>}, {pipeline_mode = #tpu.pipeline_mode<synchronous>, transform_indices = @transform_19, window_bounds = array<i64: 1, 16>}, {transform_indices = @transform_20, window_bounds = array<i64: 16, 16>}]} {
    %c0 = arith.constant 0 : index
    %c0_0 = arith.constant 0 : index
    %0 = vector.load %arg2[%c0, %c0_0] : memref<16x1xf32, #tpu.memory_space<vmem>>, vector<16x1xf32>
    %c0_1 = arith.constant 0 : index
    %c0_2 = arith.constant 0 : index
    %1 = vector.load %arg3[%c0_1, %c0_2] : memref<1x64xf32, #tpu.memory_space<vmem>>, vector<1x64xf32>
    %2 = vector.broadcast %0 : vector<16x1xf32> to vector<16x64xf32>
    %3 = vector.broadcast %1 : vector<1x64xf32> to vector<16x64xf32>
    %4 = arith.mulf %2, %3 : vector<16x64xf32>
    %5 = math.sin %4 : vector<16x64xf32>
    %6 = math.cos %4 : vector<16x64xf32>
    %7 = tpu.concatenate %5, %6 in 1 : vector<16x64xf32>, vector<16x64xf32> -> vector<16x128xf32>
    %c0_3 = arith.constant 0 : index
    %c0_4 = arith.constant 0 : index
    %8 = vector.load %arg1[%c0_3, %c0_4] : memref<16x16xf32, #tpu.memory_space<vmem>>, vector<16x16xf32>
    %c0_5 = arith.constant 0 : index
    %c0_6 = arith.constant 0 : index
    %9 = vector.load %arg9[%c0_5, %c0_6] : memref<16x128xf32, #tpu.memory_space<vmem>>, vector<16x128xf32>
    %cst = arith.constant dense<0.000000e+00> : vector<16x128xf32>
    %10 = tpu.matmul %8, %9, %cst {dimension_numbers = #tpu.dot_dimension_numbers<[1], [0], [0], [1], [0, 0, 1, 1], [], []>} : vector<16x16xf32>, vector<16x128xf32>, vector<16x128xf32> -> vector<16x128xf32>
    %c0_7 = arith.constant 0 : index
    %c0_8 = arith.constant 0 : index
    %11 = vector.load %arg10[%c0_7, %c0_8] : memref<128x128xf32, #tpu.memory_space<vmem>>, vector<128x128xf32>
    %cst_9 = arith.constant dense<0.000000e+00> : vector<16x128xf32>
    %12 = tpu.matmul %7, %11, %cst_9 {dimension_numbers = #tpu.dot_dimension_numbers<[1], [0], [0], [1], [0, 0, 1, 1], [], []>} : vector<16x128xf32>, vector<128x128xf32>, vector<16x128xf32> -> vector<16x128xf32>
    %13 = arith.addf %10, %12 : vector<16x128xf32>
    %c0_10 = arith.constant 0 : index
    %c0_11 = arith.constant 0 : index
    %14 = vector.load %arg12[%c0_10, %c0_11] : memref<1x128xf32, #tpu.memory_space<vmem>>, vector<1x128xf32>
    %15 = vector.broadcast %14 : vector<1x128xf32> to vector<16x128xf32>
    %16 = arith.addf %13, %15 : vector<16x128xf32>
    %c0_12 = arith.constant 0 : index
    %c0_13 = arith.constant 0 : index
    %17 = vector.load %arg4[%c0_12, %c0_13] : memref<16x1xf32, #tpu.memory_space<vmem>>, vector<16x1xf32>
    %c0_14 = arith.constant 0 : index
    %c0_15 = arith.constant 0 : index
    %18 = vector.load %arg5[%c0_14, %c0_15] : memref<1x128xf32, #tpu.memory_space<vmem>>, vector<1x128xf32>
    %cst_16 = arith.constant dense<0.000000e+00> : vector<16x128xf32>
    %19 = tpu.matmul %17, %18, %cst_16 {dimension_numbers = #tpu.dot_dimension_numbers<[1], [0], [0], [1], [0, 0, 1, 1], [], []>} : vector<16x1xf32>, vector<1x128xf32>, vector<16x128xf32> -> vector<16x128xf32>
    %c0_17 = arith.constant 0 : index
    %c0_18 = arith.constant 0 : index
    %20 = vector.load %arg6[%c0_17, %c0_18] : memref<1x128xf32, #tpu.memory_space<vmem>>, vector<1x128xf32>
    %21 = vector.broadcast %20 : vector<1x128xf32> to vector<16x128xf32>
    %22 = arith.addf %19, %21 : vector<16x128xf32>
    %cst_19 = arith.constant 5.000000e-01 : f32
    %23 = vector.broadcast %cst_19 : f32 to vector<16x128xf32>
    %24 = arith.mulf %23, %22 : vector<16x128xf32>
    %cst_20 = arith.constant 0.707106769 : f32
    %25 = vector.broadcast %cst_20 : f32 to vector<16x128xf32>
    %26 = arith.mulf %22, %25 : vector<16x128xf32>
    %27 = math.erf %26 : vector<16x128xf32>
    %cst_21 = arith.constant 1.000000e+00 : f32
    %28 = vector.broadcast %cst_21 : f32 to vector<16x128xf32>
    %29 = arith.addf %28, %27 : vector<16x128xf32>
    %30 = arith.mulf %24, %29 : vector<16x128xf32>
    %c0_22 = arith.constant 0 : index
    %c0_23 = arith.constant 0 : index
    %31 = vector.load %arg7[%c0_22, %c0_23] : memref<128x128xf32, #tpu.memory_space<vmem>>, vector<128x128xf32>
    %cst_24 = arith.constant dense<0.000000e+00> : vector<16x128xf32>
    %32 = tpu.matmul %30, %31, %cst_24 {dimension_numbers = #tpu.dot_dimension_numbers<[1], [0], [0], [1], [0, 0, 1, 1], [], []>} : vector<16x128xf32>, vector<128x128xf32>, vector<16x128xf32> -> vector<16x128xf32>
    %c0_25 = arith.constant 0 : index
    %c0_26 = arith.constant 0 : index
    %33 = vector.load %arg8[%c0_25, %c0_26] : memref<1x128xf32, #tpu.memory_space<vmem>>, vector<1x128xf32>
    %34 = vector.broadcast %33 : vector<1x128xf32> to vector<16x128xf32>
    %35 = arith.addf %32, %34 : vector<16x128xf32>
    %c0_27 = arith.constant 0 : index
    %c0_28 = arith.constant 0 : index
    %36 = vector.load %arg11[%c0_27, %c0_28] : memref<128x128xf32, #tpu.memory_space<vmem>>, vector<128x128xf32>
    %cst_29 = arith.constant dense<0.000000e+00> : vector<16x128xf32>
    %37 = tpu.matmul %35, %36, %cst_29 {dimension_numbers = #tpu.dot_dimension_numbers<[1], [0], [0], [1], [0, 0, 1, 1], [], []>} : vector<16x128xf32>, vector<128x128xf32>, vector<16x128xf32> -> vector<16x128xf32>
    %38 = arith.addf %16, %37 : vector<16x128xf32>
    %cst_30 = arith.constant 5.000000e-01 : f32
    %39 = vector.broadcast %cst_30 : f32 to vector<16x128xf32>
    %40 = arith.mulf %39, %38 : vector<16x128xf32>
    %cst_31 = arith.constant 0.707106769 : f32
    %41 = vector.broadcast %cst_31 : f32 to vector<16x128xf32>
    %42 = arith.mulf %38, %41 : vector<16x128xf32>
    %43 = math.erf %42 : vector<16x128xf32>
    %cst_32 = arith.constant 1.000000e+00 : f32
    %44 = vector.broadcast %cst_32 : f32 to vector<16x128xf32>
    %45 = arith.addf %44, %43 : vector<16x128xf32>
    %46 = arith.mulf %40, %45 : vector<16x128xf32>
    %c0_33 = arith.constant 0 : index
    %c0_34 = arith.constant 0 : index
    %47 = vector.load %arg13[%c0_33, %c0_34] : memref<128x128xf32, #tpu.memory_space<vmem>>, vector<128x128xf32>
    %cst_35 = arith.constant dense<0.000000e+00> : vector<16x128xf32>
    %48 = tpu.matmul %46, %47, %cst_35 {dimension_numbers = #tpu.dot_dimension_numbers<[1], [0], [0], [1], [0, 0, 1, 1], [], []>} : vector<16x128xf32>, vector<128x128xf32>, vector<16x128xf32> -> vector<16x128xf32>
    %c0_36 = arith.constant 0 : index
    %c0_37 = arith.constant 0 : index
    %49 = vector.load %arg14[%c0_36, %c0_37] : memref<1x128xf32, #tpu.memory_space<vmem>>, vector<1x128xf32>
    %50 = vector.broadcast %49 : vector<1x128xf32> to vector<16x128xf32>
    %51 = arith.addf %48, %50 : vector<16x128xf32>
    %cst_38 = arith.constant 5.000000e-01 : f32
    %52 = vector.broadcast %cst_38 : f32 to vector<16x128xf32>
    %53 = arith.mulf %52, %51 : vector<16x128xf32>
    %cst_39 = arith.constant 0.707106769 : f32
    %54 = vector.broadcast %cst_39 : f32 to vector<16x128xf32>
    %55 = arith.mulf %51, %54 : vector<16x128xf32>
    %56 = math.erf %55 : vector<16x128xf32>
    %cst_40 = arith.constant 1.000000e+00 : f32
    %57 = vector.broadcast %cst_40 : f32 to vector<16x128xf32>
    %58 = arith.addf %57, %56 : vector<16x128xf32>
    %59 = arith.mulf %53, %58 : vector<16x128xf32>
    %c0_41 = arith.constant 0 : index
    %c0_42 = arith.constant 0 : index
    %60 = vector.load %arg15[%c0_41, %c0_42] : memref<128x128xf32, #tpu.memory_space<vmem>>, vector<128x128xf32>
    %cst_43 = arith.constant dense<0.000000e+00> : vector<16x128xf32>
    %61 = tpu.matmul %59, %60, %cst_43 {dimension_numbers = #tpu.dot_dimension_numbers<[1], [0], [0], [1], [0, 0, 1, 1], [], []>} : vector<16x128xf32>, vector<128x128xf32>, vector<16x128xf32> -> vector<16x128xf32>
    %c0_44 = arith.constant 0 : index
    %c0_45 = arith.constant 0 : index
    %62 = vector.load %arg16[%c0_44, %c0_45] : memref<1x128xf32, #tpu.memory_space<vmem>>, vector<1x128xf32>
    %63 = vector.broadcast %62 : vector<1x128xf32> to vector<16x128xf32>
    %64 = arith.addf %61, %63 : vector<16x128xf32>
    %cst_46 = arith.constant dense<0.000000e+00> : vector<16xf32>
    %65 = vector.multi_reduction <add>, %64, %cst_46 [1] : vector<16x128xf32> to vector<16xf32>
    %66 = vector.shape_cast %65 : vector<16xf32> to vector<16x1xf32>
    %cst_47 = arith.constant 1.280000e+02 : f32
    %67 = vector.broadcast %cst_47 : f32 to vector<16x1xf32>
    %68 = arith.divf %66, %67 : vector<16x1xf32>
    %69 = arith.mulf %64, %64 : vector<16x128xf32>
    %cst_48 = arith.constant dense<0.000000e+00> : vector<16xf32>
    %70 = vector.multi_reduction <add>, %69, %cst_48 [1] : vector<16x128xf32> to vector<16xf32>
    %71 = vector.shape_cast %70 : vector<16xf32> to vector<16x1xf32>
    %cst_49 = arith.constant 1.280000e+02 : f32
    %72 = vector.broadcast %cst_49 : f32 to vector<16x1xf32>
    %73 = arith.divf %71, %72 : vector<16x1xf32>
    %74 = arith.mulf %68, %68 : vector<16x1xf32>
    %75 = arith.subf %73, %74 : vector<16x1xf32>
    %76 = vector.broadcast %68 : vector<16x1xf32> to vector<16x128xf32>
    %77 = arith.subf %64, %76 : vector<16x128xf32>
    %cst_50 = arith.constant 9.99999974E-6 : f32
    %78 = vector.broadcast %cst_50 : f32 to vector<16x1xf32>
    %79 = arith.addf %75, %78 : vector<16x1xf32>
    %80 = math.rsqrt %79 : vector<16x1xf32>
    %81 = vector.broadcast %80 : vector<16x1xf32> to vector<16x128xf32>
    %82 = arith.mulf %77, %81 : vector<16x128xf32>
    %c0_51 = arith.constant 0 : index
    %c0_52 = arith.constant 0 : index
    %83 = vector.load %arg17[%c0_51, %c0_52] : memref<1x128xf32, #tpu.memory_space<vmem>>, vector<1x128xf32>
    %84 = vector.broadcast %83 : vector<1x128xf32> to vector<16x128xf32>
    %85 = arith.mulf %82, %84 : vector<16x128xf32>
    %c0_53 = arith.constant 0 : index
    %c0_54 = arith.constant 0 : index
    %86 = vector.load %arg18[%c0_53, %c0_54] : memref<1x128xf32, #tpu.memory_space<vmem>>, vector<1x128xf32>
    %87 = vector.broadcast %86 : vector<1x128xf32> to vector<16x128xf32>
    %88 = arith.addf %85, %87 : vector<16x128xf32>
    %cst_55 = arith.constant 5.000000e-01 : f32
    %89 = vector.broadcast %cst_55 : f32 to vector<16x128xf32>
    %90 = arith.mulf %89, %88 : vector<16x128xf32>
    %cst_56 = arith.constant 0.707106769 : f32
    %91 = vector.broadcast %cst_56 : f32 to vector<16x128xf32>
    %92 = arith.mulf %88, %91 : vector<16x128xf32>
    %93 = math.erf %92 : vector<16x128xf32>
    %cst_57 = arith.constant 1.000000e+00 : f32
    %94 = vector.broadcast %cst_57 : f32 to vector<16x128xf32>
    %95 = arith.addf %94, %93 : vector<16x128xf32>
    %96 = arith.mulf %90, %95 : vector<16x128xf32>
    %c0_58 = arith.constant 0 : index
    %c0_59 = arith.constant 0 : index
    %97 = vector.load %arg19[%c0_58, %c0_59] : memref<128x16xf32, #tpu.memory_space<vmem>>, vector<128x16xf32>
    %cst_60 = arith.constant dense<0.000000e+00> : vector<16x16xf32>
    %98 = tpu.matmul %96, %97, %cst_60 {dimension_numbers = #tpu.dot_dimension_numbers<[1], [0], [0], [1], [0, 0, 1, 1], [], []>} : vector<16x128xf32>, vector<128x16xf32>, vector<16x16xf32> -> vector<16x16xf32>
    %c0_61 = arith.constant 0 : index
    %c0_62 = arith.constant 0 : index
    %99 = vector.load %arg20[%c0_61, %c0_62] : memref<1x16xf32, #tpu.memory_space<vmem>>, vector<1x16xf32>
    %100 = vector.broadcast %99 : vector<1x16xf32> to vector<16x16xf32>
    %101 = arith.addf %98, %100 : vector<16x16xf32>
    %c0_63 = arith.constant 0 : index
    %c0_64 = arith.constant 0 : index
    %102 = vector.load %arg21[%c0_63, %c0_64] : memref<16x16xf32, #tpu.memory_space<vmem>>, vector<16x16xf32>
    tpu.vector_store %arg21[%c0_63, %c0_64], %101 {strides = array<i32>} : memref<16x16xf32, #tpu.memory_space<vmem>>, vector<16x16xf32>,
    return
  }
  func.func @transform_0(%arg0: i32) -> (i32, i32) {
    %c0_i32 = arith.constant 0 : i32
    %c0_i32_0 = arith.constant 0 : i32
    return %arg0, %c0_i32 : i32, i32
  }
  func.func @transform_1(%arg0: i32) -> (i32, i32) {
    %c0_i32 = arith.constant 0 : i32
    %c0_i32_0 = arith.constant 0 : i32
    return %arg0, %c0_i32 : i32, i32
  }
  func.func @transform_2(%arg0: i32) -> (i32, i32) {
    %c0_i32 = arith.constant 0 : i32
    %c0_i32_0 = arith.constant 0 : i32
    %c0_i32_1 = arith.constant 0 : i32
    return %c0_i32, %c0_i32_0 : i32, i32
  }
  func.func @transform_3(%arg0: i32) -> (i32, i32) {
    %c0_i32 = arith.constant 0 : i32
    %c0_i32_0 = arith.constant 0 : i32
    return %arg0, %c0_i32 : i32, i32
  }
  func.func @transform_4(%arg0: i32) -> (i32, i32) {
    %c0_i32 = arith.constant 0 : i32
    %c0_i32_0 = arith.constant 0 : i32
    %c0_i32_1 = arith.constant 0 : i32
    return %c0_i32, %c0_i32_0 : i32, i32
  }
  func.func @transform_5(%arg0: i32) -> (i32, i32) {
    %c0_i32 = arith.constant 0 : i32
    %c0_i32_0 = arith.constant 0 : i32
    %c0_i32_1 = arith.constant 0 : i32
    return %c0_i32, %c0_i32_0 : i32, i32
  }
  func.func @transform_6(%arg0: i32) -> (i32, i32) {
    %c0_i32 = arith.constant 0 : i32
    %c0_i32_0 = arith.constant 0 : i32
    %c0_i32_1 = arith.constant 0 : i32
    return %c0_i32, %c0_i32_0 : i32, i32
  }
  func.func @transform_7(%arg0: i32) -> (i32, i32) {
    %c0_i32 = arith.constant 0 : i32
    %c0_i32_0 = arith.constant 0 : i32
    %c0_i32_1 = arith.constant 0 : i32
    return %c0_i32, %c0_i32_0 : i32, i32
  }
  func.func @transform_8(%arg0: i32) -> (i32, i32) {
    %c0_i32 = arith.constant 0 : i32
    %c0_i32_0 = arith.constant 0 : i32
    %c0_i32_1 = arith.constant 0 : i32
    return %c0_i32, %c0_i32_0 : i32, i32
  }
  func.func @transform_9(%arg0: i32) -> (i32, i32) {
    %c0_i32 = arith.constant 0 : i32
    %c0_i32_0 = arith.constant 0 : i32
    %c0_i32_1 = arith.constant 0 : i32
    return %c0_i32, %c0_i32_0 : i32, i32
  }
  func.func @transform_10(%arg0: i32) -> (i32, i32) {
    %c0_i32 = arith.constant 0 : i32
    %c0_i32_0 = arith.constant 0 : i32
    %c0_i32_1 = arith.constant 0 : i32
    return %c0_i32, %c0_i32_0 : i32, i32
  }
  func.func @transform_11(%arg0: i32) -> (i32, i32) {
    %c0_i32 = arith.constant 0 : i32
    %c0_i32_0 = arith.constant 0 : i32
    %c0_i32_1 = arith.constant 0 : i32
    return %c0_i32, %c0_i32_0 : i32, i32
  }
  func.func @transform_12(%arg0: i32) -> (i32, i32) {
    %c0_i32 = arith.constant 0 : i32
    %c0_i32_0 = arith.constant 0 : i32
    %c0_i32_1 = arith.constant 0 : i32
    return %c0_i32, %c0_i32_0 : i32, i32
  }
  func.func @transform_13(%arg0: i32) -> (i32, i32) {
    %c0_i32 = arith.constant 0 : i32
    %c0_i32_0 = arith.constant 0 : i32
    %c0_i32_1 = arith.constant 0 : i32
    return %c0_i32, %c0_i32_0 : i32, i32
  }
  func.func @transform_14(%arg0: i32) -> (i32, i32) {
    %c0_i32 = arith.constant 0 : i32
    %c0_i32_0 = arith.constant 0 : i32
    %c0_i32_1 = arith.constant 0 : i32
    return %c0_i32, %c0_i32_0 : i32, i32
  }
  func.func @transform_15(%arg0: i32) -> (i32, i32) {
    %c0_i32 = arith.constant 0 : i32
    %c0_i32_0 = arith.constant 0 : i32
    %c0_i32_1 = arith.constant 0 : i32
    return %c0_i32, %c0_i32_0 : i32, i32
  }
  func.func @transform_16(%arg0: i32) -> (i32, i32) {
    %c0_i32 = arith.constant 0 : i32
    %c0_i32_0 = arith.constant 0 : i32
    %c0_i32_1 = arith.constant 0 : i32
    return %c0_i32, %c0_i32_0 : i32, i32
  }
  func.func @transform_17(%arg0: i32) -> (i32, i32) {
    %c0_i32 = arith.constant 0 : i32
    %c0_i32_0 = arith.constant 0 : i32
    %c0_i32_1 = arith.constant 0 : i32
    return %c0_i32, %c0_i32_0 : i32, i32
  }
  func.func @transform_18(%arg0: i32) -> (i32, i32) {
    %c0_i32 = arith.constant 0 : i32
    %c0_i32_0 = arith.constant 0 : i32
    %c0_i32_1 = arith.constant 0 : i32
    return %c0_i32, %c0_i32_0 : i32, i32
  }
  func.func @transform_19(%arg0: i32) -> (i32, i32) {
    %c0_i32 = arith.constant 0 : i32
    %c0_i32_0 = arith.constant 0 : i32
    %c0_i32_1 = arith.constant 0 : i32
    return %c0_i32, %c0_i32_0 : i32, i32
  }
  func.func @transform_20(%arg0: i32) -> (i32, i32) {
    %c0_i32 = arith.constant 0 : i32
    %c0_i32_0 = arith.constant 0 : i32
    return %arg0, %c0_i32 : i32, i32
  }
}

</mosaic_0001>

<llo_original>
// kernel: tpu_custom_call.1
$region0: #{tpu_custom_call.1}
  #allocation0 [shape = 'u32[]', space=smem, size = 0x4, offset = 0x4, fixed_abs, tag = 'smem constant byte address 0x4 - core index']
  #allocation1 [shape = 'u32[72,128]{1,0:T(1,128)}', space=vmem, size = 0x9000, scoped, tag = 'internal scratch']
  %s0 = inlined_call_operand.vmem [shape: f32[16,16], index: 0, kind: input, shape index: {}]
  %s1 = inlined_call_operand.vmem [shape: f32[16,1], index: 1, kind: input, shape index: {}]
  %s2 = inlined_call_operand.vmem [shape: f32[1,64], index: 2, kind: input, shape index: {}]
  %s3 = inlined_call_operand.vmem [shape: f32[16,1], index: 3, kind: input, shape index: {}]
  %s4 = inlined_call_operand.vmem [shape: f32[1,128], index: 4, kind: input, shape index: {}]
  %s5 = inlined_call_operand.vmem [shape: f32[1,128], index: 5, kind: input, shape index: {}]
  %s6 = inlined_call_operand.vmem [shape: f32[128,128], index: 6, kind: input, shape index: {}]
  %s7 = inlined_call_operand.vmem [shape: f32[1,128], index: 7, kind: input, shape index: {}]
  %s8 = inlined_call_operand.vmem [shape: f32[16,128], index: 8, kind: input, shape index: {}]
  %s9 = inlined_call_operand.hbm [shape: f32[128,128], index: 9, kind: input, shape index: {}]
  %s10 = inlined_call_operand.hbm [shape: f32[128,128], index: 10, kind: input, shape index: {}]
  %s11 = inlined_call_operand.vmem [shape: f32[1,128], index: 11, kind: input, shape index: {}]
  %s12 = inlined_call_operand.hbm [shape: f32[128,128], index: 12, kind: input, shape index: {}]
  %s13 = inlined_call_operand.vmem [shape: f32[1,128], index: 13, kind: input, shape index: {}]
  %s14 = inlined_call_operand.hbm [shape: f32[128,128], index: 14, kind: input, shape index: {}]
  %s15 = inlined_call_operand.vmem [shape: f32[1,128], index: 15, kind: input, shape index: {}]
  %s16 = inlined_call_operand.vmem [shape: f32[1,128], index: 16, kind: input, shape index: {}]
  %s17 = inlined_call_operand.vmem [shape: f32[1,128], index: 17, kind: input, shape index: {}]
  %s18 = inlined_call_operand.vmem [shape: f32[128,16], index: 18, kind: input, shape index: {}]
  %s19 = inlined_call_operand.vmem [shape: f32[1,16], index: 19, kind: input, shape index: {}]
  %s20 = inlined_call_operand.hbm [shape: f32[16,16], index: 20, kind: output, shape index: {}]
  %s21 = sld [smem:[#allocation0]]
  $region106: #{tpu_custom_call.1} parent=0
    _
  %s23 = ssub.s32 1, %s21
  %s24 = scalar_select 0, %s23, %s21
  $region1: #{tpu_custom_call.1} parent=0
    #allocation2 [shape = 'u8[65536]{0}', space=vmem, size = 0x10000, scoped, tag = 'input window, operand 9, single buffered']
    #allocation3 [shape = 's32[1]{0}', space=sflag, size = 0x4, scoped, tag = 'scoped memory for tpu_custom_call.1']
    #allocation4 [shape = 's32[1]{0}', space=sflag, size = 0x4, scoped, tag = 'scoped memory for tpu_custom_call.1']
    #allocation5 [shape = 'u8[65536]{0}', space=vmem, size = 0x10000, scoped, tag = 'input window, operand 10, single buffered']
    #allocation6 [shape = 's32[1]{0}', space=sflag, size = 0x4, scoped, tag = 'scoped memory for tpu_custom_call.1']
    #allocation7 [shape = 'u8[65536]{0}', space=vmem, size = 0x10000, scoped, tag = 'input window, operand 12, single buffered']
    #allocation8 [shape = 'u8[65536]{0}', space=vmem, size = 0x10000, scoped, tag = 'input window, operand 14, single buffered']
    #allocation9 [shape = 's32[1]{0}', space=sflag, size = 0x4, scoped, tag = 'scoped memory for tpu_custom_call.1']
    #allocation10 [shape = 'u8[8192]{0}', space=vmem, size = 0x2000, scoped, tag = 'output window, operand 0, single buffered']
    %25 = vsyncpa [#allocation3], 0
    %26 = vsyncpa [#allocation6], 0
    %27 = vsyncpa [#allocation9], 0
    %28 = vsyncpa [#allocation4], 0
    // Predicated region
    $region2: #{tpu_custom_call.1} parent=1 // pred_check
      _
    $region3: #{tpu_custom_call.1} parent=1 // pred_check_branch
      %30 = sbr.rel (0) target = $region5
    $region4: #{tpu_custom_call.1} parent=1 // pred_region
      _
    $region5: #{tpu_custom_call.1} parent=1 // pred_fallthru
      _
    // Predicated region
    $region6: #{tpu_custom_call.1} parent=1 // pred_check
      _
    $region7: #{tpu_custom_call.1} parent=1 // pred_check_branch
      %32 = sbr.rel (0) target = $region9
    $region8: #{tpu_custom_call.1} parent=1 // pred_region
      _
    $region9: #{tpu_custom_call.1} parent=1 // pred_fallthru
      _
    // Predicated region
    $region10: #{tpu_custom_call.1} parent=1 // pred_check
      _
    $region11: #{tpu_custom_call.1} parent=1 // pred_check_branch
      %34 = sbr.rel (0) target = $region13
    $region12: #{tpu_custom_call.1} parent=1 // pred_region
      _
    $region13: #{tpu_custom_call.1} parent=1 // pred_fallthru
      _
    // Predicated region
    $region14: #{tpu_custom_call.1} parent=1 // pred_check
      _
    $region15: #{tpu_custom_call.1} parent=1 // pred_check_branch
      %36 = sbr.rel (0) target = $region17
    $region16: #{tpu_custom_call.1} parent=1 // pred_region
      _
    $region17: #{tpu_custom_call.1} parent=1 // pred_fallthru
      _
    // Predicated region
    $region18: #{tpu_custom_call.1} parent=1 // pred_check
      _
    $region19: #{tpu_custom_call.1} parent=1 // pred_check_branch
      %38 = sbr.rel (0) target = $region21
    $region20: #{tpu_custom_call.1} parent=1 // pred_region
      _
    $region21: #{tpu_custom_call.1} parent=1 // pred_fallthru
      _
    // Predicated region
    $region22: #{tpu_custom_call.1} parent=1 // pred_check
      _
    $region23: #{tpu_custom_call.1} parent=1 // pred_check_branch
      %40 = sbr.rel (0) target = $region25
    $region24: #{tpu_custom_call.1} parent=1 // pred_region
      _
    $region25: #{tpu_custom_call.1} parent=1 // pred_fallthru
      _
    // Predicated region
    $region26: #{tpu_custom_call.1} parent=1 // pred_check
      _
    $region27: #{tpu_custom_call.1} parent=1 // pred_check_branch
      %42 = sbr.rel (0) target = $region29
    $region28: #{tpu_custom_call.1} parent=1 // pred_region
      _
    $region29: #{tpu_custom_call.1} parent=1 // pred_fallthru
      _
    // Predicated region
    $region30: #{tpu_custom_call.1} parent=1 // pred_check
      _
    $region31: #{tpu_custom_call.1} parent=1 // pred_check_branch
      %44 = sbr.rel (0) target = $region33
    $region32: #{tpu_custom_call.1} parent=1 // pred_region
      _
    $region33: #{tpu_custom_call.1} parent=1 // pred_fallthru
      _
    // Predicated region
    $region34: #{tpu_custom_call.1} parent=1 // pred_check
      _
    $region35: #{tpu_custom_call.1} parent=1 // pred_check_branch
      %46 = sbr.rel (0) target = $region37
    $region36: #{tpu_custom_call.1} parent=1 // pred_region
      _
    $region37: #{tpu_custom_call.1} parent=1 // pred_fallthru
      _
    // Predicated region
    $region38: #{tpu_custom_call.1} parent=1 // pred_check
      _
    $region39: #{tpu_custom_call.1} parent=1 // pred_check_branch
      %48 = sbr.rel (0) target = $region41
    $region40: #{tpu_custom_call.1} parent=1 // pred_region
      %50 = vsyncadd [#allocation3], 0
      %s51 = sshll.u32 %s9, 4
      %s52 = int_to_ptr.hbm [resolvable:$true] %s51
      %s53 = sshll.u32 [#allocation2], 4
      %s54 = int_to_ptr.vmem [resolvable:$true] %s53
      %59 = dma.hbm_to_vmem [thread:$0]  %s52, 2048, %s54, [#allocation3], 128, 128, 8
    $region41: #{tpu_custom_call.1} parent=1 // pred_fallthru
      _
    // Predicated region
    $region42: #{tpu_custom_call.1} parent=1 // pred_check
      _
    $region43: #{tpu_custom_call.1} parent=1 // pred_check_branch
      %61 = sbr.rel (0) target = $region45
    $region44: #{tpu_custom_call.1} parent=1 // pred_region
      %63 = vsyncadd [#allocation6], 0
      %s64 = sshll.u32 %s10, 4
      %s65 = int_to_ptr.hbm [resolvable:$true] %s64
      %s66 = sshll.u32 [#allocation5], 4
      %s67 = int_to_ptr.vmem [resolvable:$true] %s66
      %72 = dma.hbm_to_vmem [thread:$0]  %s65, 2048, %s67, [#allocation6], 128, 128, 8
    $region45: #{tpu_custom_call.1} parent=1 // pred_fallthru
      _
    // Predicated region
    $region46: #{tpu_custom_call.1} parent=1 // pred_check
      _
    $region47: #{tpu_custom_call.1} parent=1 // pred_check_branch
      %74 = sbr.rel (0) target = $region49
    $region48: #{tpu_custom_call.1} parent=1 // pred_region
      _
    $region49: #{tpu_custom_call.1} parent=1 // pred_fallthru
      _
    // Predicated region
    $region50: #{tpu_custom_call.1} parent=1 // pred_check
      _
    $region51: #{tpu_custom_call.1} parent=1 // pred_check_branch
      %76 = sbr.rel (0) target = $region53
    $region52: #{tpu_custom_call.1} parent=1 // pred_region
      %78 = vsyncadd [#allocation6], 0
      %s79 = sshll.u32 %s12, 4
      %s80 = int_to_ptr.hbm [resolvable:$true] %s79
      %s81 = sshll.u32 [#allocation7], 4
      %s82 = int_to_ptr.vmem [resolvable:$true] %s81
      %87 = dma.hbm_to_vmem [thread:$0]  %s80, 2048, %s82, [#allocation6], 128, 128, 8
    $region53: #{tpu_custom_call.1} parent=1 // pred_fallthru
      _
    // Predicated region
    $region54: #{tpu_custom_call.1} parent=1 // pred_check
      _
    $region55: #{tpu_custom_call.1} parent=1 // pred_check_branch
      %89 = sbr.rel (0) target = $region57
    $region56: #{tpu_custom_call.1} parent=1 // pred_region
      _
    $region57: #{tpu_custom_call.1} parent=1 // pred_fallthru
      _
    // Predicated region
    $region58: #{tpu_custom_call.1} parent=1 // pred_check
      _
    $region59: #{tpu_custom_call.1} parent=1 // pred_check_branch
      %91 = sbr.rel (0) target = $region61
    $region60: #{tpu_custom_call.1} parent=1 // pred_region
      %93 = vsyncadd [#allocation9], 0
      %s94 = sshll.u32 %s14, 4
      %s95 = int_to_ptr.hbm [resolvable:$true] %s94
      %s96 = sshll.u32 [#allocation8], 4
      %s97 = int_to_ptr.vmem [resolvable:$true] %s96
      %102 = dma.hbm_to_vmem [thread:$0]  %s95, 2048, %s97, [#allocation9], 128, 128, 8
    $region61: #{tpu_custom_call.1} parent=1 // pred_fallthru
      _
    // Predicated region
    $region62: #{tpu_custom_call.1} parent=1 // pred_check
      _
    $region63: #{tpu_custom_call.1} parent=1 // pred_check_branch
      %104 = sbr.rel (0) target = $region65
    $region64: #{tpu_custom_call.1} parent=1 // pred_region
      _
    $region65: #{tpu_custom_call.1} parent=1 // pred_fallthru
      _
    // Predicated region
    $region66: #{tpu_custom_call.1} parent=1 // pred_check
      _
    $region67: #{tpu_custom_call.1} parent=1 // pred_check_branch
      %106 = sbr.rel (0) target = $region69
    $region68: #{tpu_custom_call.1} parent=1 // pred_region
      _
    $region69: #{tpu_custom_call.1} parent=1 // pred_fallthru
      _
    // Predicated region
    $region70: #{tpu_custom_call.1} parent=1 // pred_check
      _
    $region71: #{tpu_custom_call.1} parent=1 // pred_check_branch
      %108 = sbr.rel (0) target = $region73
    $region72: #{tpu_custom_call.1} parent=1 // pred_region
      _
    $region73: #{tpu_custom_call.1} parent=1 // pred_fallthru
      _
    // Predicated region
    $region74: #{tpu_custom_call.1} parent=1 // pred_check
      _
    $region75: #{tpu_custom_call.1} parent=1 // pred_check_branch
      %110 = sbr.rel (0) target = $region77
    $region76: #{tpu_custom_call.1} parent=1 // pred_region
      _
    $region77: #{tpu_custom_call.1} parent=1 // pred_fallthru
      _
    // Predicated region
    $region78: #{tpu_custom_call.1} parent=1 // pred_check
      _
    $region79: #{tpu_custom_call.1} parent=1 // pred_check_branch
      %112 = sbr.rel (0) target = $region81
    $region80: #{tpu_custom_call.1} parent=1 // pred_region
      _
    $region81: #{tpu_custom_call.1} parent=1 // pred_fallthru
      _
    // Predicated region
    $region82: #{tpu_custom_call.1} parent=1 // pred_check
      _
    $region83: #{tpu_custom_call.1} parent=1 // pred_check_branch
      %114 = sbr.rel (0) target = $region85
    $region84: #{tpu_custom_call.1} parent=1 // pred_region
      %116 = dma.done [#allocation3], 2048
    $region85: #{tpu_custom_call.1} parent=1 // pred_fallthru
      _
    // Predicated region
    $region86: #{tpu_custom_call.1} parent=1 // pred_check
      _
    $region87: #{tpu_custom_call.1} parent=1 // pred_check_branch
      %118 = sbr.rel (0) target = $region89
    $region88: #{tpu_custom_call.1} parent=1 // pred_region
      %120 = dma.done [#allocation6], 2048
    $region89: #{tpu_custom_call.1} parent=1 // pred_fallthru
      _
    // Predicated region
    $region90: #{tpu_custom_call.1} parent=1 // pred_check
      _
    $region91: #{tpu_custom_call.1} parent=1 // pred_check_branch
      %122 = sbr.rel (0) target = $region93
    $region92: #{tpu_custom_call.1} parent=1 // pred_region
      %124 = dma.done [#allocation6], 2048
    $region93: #{tpu_custom_call.1} parent=1 // pred_fallthru
      _
    // Predicated region
    $region94: #{tpu_custom_call.1} parent=1 // pred_check
      _
    $region95: #{tpu_custom_call.1} parent=1 // pred_check_branch
      %126 = sbr.rel (0) target = $region97
    $region96: #{tpu_custom_call.1} parent=1 // pred_region
      %128 = dma.done [#allocation9], 2048
    $region97: #{tpu_custom_call.1} parent=1 // pred_fallthru
      _
    %v129 = vld [vmem:[%s1] sm:$0xff]
    %v130 = vld [vmem:[%s1 + $0x8] sm:$0xff]
    %v131 = vld [vmem:[%s2] sm:$0x1]
    %133 = vset.pattern.permute.xlu0 0
    %134 = vperm.xlu0 %133, %v129
    %v135 = vpop.permute.xlu0 %134
    %138 = vset.pattern.permute.xlu0 0
    %139 = vperm.xlu0 %138, %v130
    %v140 = vpop.permute.xlu0 %139
    %v143 = vperm.slane %v131, 0
    %v145 = vmul.f32 %v135, %v143
    %v146 = vmul.f32 %v140, %v143
    %v147 = vand.u32 2147483647, %v145
    %vm148 = vcmp.le.f32.partialorder %v147, 0.7853982
    %vm149 = vcmp.lt.s32.totalorder %v145, 0
    %v150 = vand.u32 %v145, 2139095040
    %v151 = vshrl.u32 %v150, 23
    %v152 = vsub.s32 %v151, 127
    %v153 = vand.u32 2147483647, %v145
    %v154 = vand.u32 %v153, 8388607
    %v155 = vor.u32 %v154, 8388608
    %v156 = vsub.s32 0, %v155
    %v157 = vadd.s32 %v152, 1
    %vm158 = vcmp.gt.s32.totalorder %v157, 0
    %v159 = vsel %vm158, %v157, 0
    %v160 = vshrl.u32 %v159, 5
    %v161 = vand.u32 %v159, 31
    %v162 = vsub.s32 32, %v161
    %v163 = vshrl.u32 683565275, %v162
    %v164 = vshll.u32 683565275, %v161
    %v165 = vshrl.u32 2475754826, %v162
    %v166 = vor.u32 %v164, %v165
    %v167 = vshll.u32 2475754826, %v161
    %v168 = vshrl.u32 2131351028, %v162
    %v169 = vor.u32 %v167, %v168
    %v170 = vshll.u32 2131351028, %v161
    %v171 = vshrl.u32 2102212464, %v162
    %v172 = vor.u32 %v170, %v171
    %v173 = vshll.u32 2102212464, %v161
    %v174 = vshrl.u32 920167782, %v162
    %v175 = vor.u32 %v173, %v174
    %v176 = vshll.u32 920167782, %v161
    %v177 = vshrl.u32 1326507024, %v162
    %v178 = vor.u32 %v176, %v177
    %vm179 = vcmp.lt.s32.totalorder %v160, 1
    %vm180 = vcmp.lt.s32.totalorder %v160, 2
    %vm181 = vcmp.lt.s32.totalorder %v160, 3
    %vm182 = vcmp.lt.s32.totalorder %v160, 4
    %v183 = vsel %vm179, %v163, %v166
    %v184 = vsel %vm182, %v172, 2102212464
    %v185 = vsel %vm181, %v169, %v184
    %v186 = vsel %vm180, %v183, %v185
    %v187 = vsel %vm179, %v166, %v169
    %v188 = vsel %vm182, %v175, 920167782
    %v189 = vsel %vm181, %v172, %v188
    %v190 = vsel %vm180, %v187, %v189
    %v191 = vsel %vm179, %v169, %v172
    %v192 = vsel %vm182, %v178, 1326507024
    %v193 = vsel %vm181, %v175, %v192
    %v194 = vsel %vm180, %v191, %v193
    %v195 = vshll.u32 %v155, 8
    %v196 = vand.u32 %v195, 65535
    %v197 = vshrl.u32 %v195, 16
    %v198 = vand.u32 %v194, 65535
    %v199 = vshrl.u32 %v194, 16
    %v200 = vmul.u32 %v196, %v198
    %v201 = vmul.u32 %v196, %v199
    %v202 = vmul.u32 %v197, %v198
    %v203 = vmul.u32 %v197, %v199
    %v204 = vshll.u32 %v201, 16
    %v205 = vshrl.u32 %v201, 16
    %v206 = vshll.u32 %v202, 16
    %v207 = vshrl.u32 %v202, 16
    %vm208 = vc.u32 %v200, %v204
    %v209 = vsel %vm208, 1, 0
    %v210 = vadd.s32 %v200, %v204
    %v211 = vadd.s32 %v203, %v209
    %vm212 = vc.u32 %v210, %v206
    %v213 = vsel %vm212, 1, 0
    %v214 = vadd.s32 %v210, %v206
    %v215 = vadd.s32 %v211, %v213
    %v216 = vadd.s32 %v215, %v205
    %v217 = vadd.s32 %v216, %v207
    %v218 = vand.u32 %v195, 65535
    %v219 = vshrl.u32 %v195, 16
    %v220 = vand.u32 %v190, 65535
    %v221 = vshrl.u32 %v190, 16
    %v222 = vmul.u32 %v218, %v220
    %v223 = vmul.u32 %v218, %v221
    %v224 = vmul.u32 %v219, %v220
    %v225 = vmul.u32 %v219, %v221
    %v226 = vshll.u32 %v223, 16
    %v227 = vshrl.u32 %v223, 16
    %v228 = vshll.u32 %v224, 16
    %v229 = vshrl.u32 %v224, 16
    %vm230 = vc.u32 %v222, %v226
    %v231 = vsel %vm230, 1, 0
    %v232 = vadd.s32 %v222, %v226
    %v233 = vadd.s32 %v225, %v231
    %vm234 = vc.u32 %v232, %v228
    %v235 = vsel %vm234, 1, 0
    %v236 = vadd.s32 %v232, %v228
    %v237 = vadd.s32 %v233, %v235
    %v238 = vadd.s32 %v237, %v227
    %v239 = vadd.s32 %v238, %v229
    %v240 = vmul.u32 %v195, %v186
    %v241 = vadd.s32 %v217, %v236
    %vm242 = vc.u32 %v217, %v236
    %v243 = vadd.s32 %v239, 1
    %v244 = vsel %vm242, %v243, %v239
    %v245 = vadd.s32 %v240, %v244
    %v246 = vadd.s32 %v245, 536870912
    %v247 = vshrl.u32 %v246, 30
    %v248 = vshll.u32 %v247, 30
    %v249 = vsub.s32 %v245, %v248
    %vm250 = vcmp.lt.s32.totalorder %v249, 0
    %v251 = vsub.s32 0, %v249
    %v252 = vsel %vm250, %v251, %v249
    %v253 = vclz %v252
    %v254 = vsub.s32 %v253, 2
    %vm255 = vcmp.gt.s32.totalorder 0, %v254
    %v256 = vsel %vm255, 0, %v254
    %v257 = vsub.s32 32, %v256
    %v258 = vshll.u32 %v249, %v256
    %v259 = vshrl.u32 %v241, %v257
    %v260 = vor.u32 %v258, %v259
    %v261 = vsub.s32 4294967266, %v256
    %v262 = vadd.s32 %v261, 127
    %v263 = vshll.u32 %v262, 23
    %v264 = vor.u32 4788187, %v263
    %v265 = vand.u32 2147483647, %v264
    %v267 = vcvt.s32.f32 %v260
    %v268 = vmul.f32 %v267, %v265
    %v269 = vxor.u32 %v268, 2147483648
    %v270 = vsel %vm149, %v269, %v268
    %v271 = vsub.s32 4, %v247
    %v272 = vsel %vm149, %v271, %v247
    %v273 = vsel %vm148, %v145, %v270
    %v274 = vsel %vm148, 0, %v272
    %v275 = vmul.f32 %v273, %v273
    %v276 = vmul.f32 %v275, -0.001358992
    %v277 = vadd.f32 %v276, 0.041655596
    %v278 = vmul.f32 %v275, %v277
    %v279 = vadd.f32 %v278, -0.4999988
    %v280 = vmul.f32 %v275, %v279
    %v281 = vadd.f32 1.0, %v280
    %v282 = vmul.f32 %v273, %v273
    %v283 = vmul.f32 %v282, -0.00019511016
    %v284 = vadd.f32 %v283, 0.008332121
    %v285 = vmul.f32 %v282, %v284
    %v286 = vadd.f32 %v285, -0.16666654
    %v287 = vmul.f32 %v282, %v286
    %v288 = vadd.f32 %v287, 1.0
    %v289 = vmul.f32 %v288, %v273
    %vm290 = vweird.f32 %v145
    %v291 = vadd.s32 %v274, 3
    %v292 = vand.u32 %v291, 3
    %vm293 = vcmp.lt.s32.totalorder %v292, 2
    %vm294 = vcmp.eq.s32.totalorder %v292, 0
    %v295 = vxor.u32 %v289, 2147483648
    %v296 = vsel %vm294, %v281, %v295
    %vm297 = vcmp.eq.s32.totalorder %v292, 2
    %v298 = vxor.u32 %v281, 2147483648
    %v299 = vsel %vm297, %v298, %v289
    %v300 = vsel %vm293, %v296, %v299
    %v301 = vsel %vm290, nan, %v300
    %v302 = vand.u32 2147483647, %v146
    %vm303 = vcmp.le.f32.partialorder %v302, 0.7853982
    %vm304 = vcmp.lt.s32.totalorder %v146, 0
    %v305 = vand.u32 %v146, 2139095040
    %v306 = vshrl.u32 %v305, 23
    %v307 = vsub.s32 %v306, 127
    %v308 = vand.u32 2147483647, %v146
    %v309 = vand.u32 %v308, 8388607
    %v310 = vor.u32 %v309, 8388608
    %v311 = vsub.s32 0, %v310
    %v312 = vadd.s32 %v307, 1
    %vm313 = vcmp.gt.s32.totalorder %v312, 0
    %v314 = vsel %vm313, %v312, 0
    %v315 = vshrl.u32 %v314, 5
    %v316 = vand.u32 %v314, 31
    %v317 = vsub.s32 32, %v316
    %v318 = vshrl.u32 683565275, %v317
    %v319 = vshll.u32 683565275, %v316
    %v320 = vshrl.u32 2475754826, %v317
    %v321 = vor.u32 %v319, %v320
    %v322 = vshll.u32 2475754826, %v316
    %v323 = vshrl.u32 2131351028, %v317
    %v324 = vor.u32 %v322, %v323
    %v325 = vshll.u32 2131351028, %v316
    %v326 = vshrl.u32 2102212464, %v317
    %v327 = vor.u32 %v325, %v326
    %v328 = vshll.u32 2102212464, %v316
    %v329 = vshrl.u32 920167782, %v317
    %v330 = vor.u32 %v328, %v329
    %v331 = vshll.u32 920167782, %v316
    %v332 = vshrl.u32 1326507024, %v317
    %v333 = vor.u32 %v331, %v332
    %vm334 = vcmp.lt.s32.totalorder %v315, 1
    %vm335 = vcmp.lt.s32.totalorder %v315, 2
    %vm336 = vcmp.lt.s32.totalorder %v315, 3
    %vm337 = vcmp.lt.s32.totalorder %v315, 4
    %v338 = vsel %vm334, %v318, %v321
    %v339 = vsel %vm337, %v327, 2102212464
    %v340 = vsel %vm336, %v324, %v339
    %v341 = vsel %vm335, %v338, %v340
    %v342 = vsel %vm334, %v321, %v324
    %v343 = vsel %vm337, %v330, 920167782
    %v344 = vsel %vm336, %v327, %v343
    %v345 = vsel %vm335, %v342, %v344
    %v346 = vsel %vm334, %v324, %v327
    %v347 = vsel %vm337, %v333, 1326507024
    %v348 = vsel %vm336, %v330, %v347
    %v349 = vsel %vm335, %v346, %v348
    %v350 = vshll.u32 %v310, 8
    %v351 = vand.u32 %v350, 65535
    %v352 = vshrl.u32 %v350, 16
    %v353 = vand.u32 %v349, 65535
    %v354 = vshrl.u32 %v349, 16
    %v355 = vmul.u32 %v351, %v353
    %v356 = vmul.u32 %v351, %v354
    %v357 = vmul.u32 %v352, %v353
    %v358 = vmul.u32 %v352, %v354
    %v359 = vshll.u32 %v356, 16
    %v360 = vshrl.u32 %v356, 16
    %v361 = vshll.u32 %v357, 16
    %v362 = vshrl.u32 %v357, 16
    %vm363 = vc.u32 %v355, %v359
    %v364 = vsel %vm363, 1, 0
    %v365 = vadd.s32 %v355, %v359
    %v366 = vadd.s32 %v358, %v364
    %vm367 = vc.u32 %v365, %v361
    %v368 = vsel %vm367, 1, 0
    %v369 = vadd.s32 %v365, %v361
    %v370 = vadd.s32 %v366, %v368
    %v371 = vadd.s32 %v370, %v360
    %v372 = vadd.s32 %v371, %v362
    %v373 = vand.u32 %v350, 65535
    %v374 = vshrl.u32 %v350, 16
    %v375 = vand.u32 %v345, 65535
    %v376 = vshrl.u32 %v345, 16
    %v377 = vmul.u32 %v373, %v375
    %v378 = vmul.u32 %v373, %v376
    %v379 = vmul.u32 %v374, %v375
    %v380 = vmul.u32 %v374, %v376
    %v381 = vshll.u32 %v378, 16
    %v382 = vshrl.u32 %v378, 16
    %v383 = vshll.u32 %v379, 16
    %v384 = vshrl.u32 %v379, 16
    %vm385 = vc.u32 %v377, %v381
    %v386 = vsel %vm385, 1, 0
    %v387 = vadd.s32 %v377, %v381
    %v388 = vadd.s32 %v380, %v386
    %vm389 = vc.u32 %v387, %v383
    %v390 = vsel %vm389, 1, 0
    %v391 = vadd.s32 %v387, %v383
    %v392 = vadd.s32 %v388, %v390
    %v393 = vadd.s32 %v392, %v382
    %v394 = vadd.s32 %v393, %v384
    %v395 = vmul.u32 %v350, %v341
    %v396 = vadd.s32 %v372, %v391
    %vm397 = vc.u32 %v372, %v391
    %v398 = vadd.s32 %v394, 1
    %v399 = vsel %vm397, %v398, %v394
    %v400 = vadd.s32 %v395, %v399
    %v401 = vadd.s32 %v400, 536870912
    %v402 = vshrl.u32 %v401, 30
    %v403 = vshll.u32 %v402, 30
    %v404 = vsub.s32 %v400, %v403
    %vm405 = vcmp.lt.s32.totalorder %v404, 0
    %v406 = vsub.s32 0, %v404
    %v407 = vsel %vm405, %v406, %v404
    %v408 = vclz %v407
    %v409 = vsub.s32 %v408, 2
    %vm410 = vcmp.gt.s32.totalorder 0, %v409
    %v411 = vsel %vm410, 0, %v409
    %v412 = vsub.s32 32, %v411
    %v413 = vshll.u32 %v404, %v411
    %v414 = vshrl.u32 %v396, %v412
    %v415 = vor.u32 %v413, %v414
    %v416 = vsub.s32 4294967266, %v411
    %v417 = vadd.s32 %v416, 127
    %v418 = vshll.u32 %v417, 23
    %v419 = vor.u32 4788187, %v418
    %v420 = vand.u32 2147483647, %v419
    %v422 = vcvt.s32.f32 %v415
    %v423 = vmul.f32 %v422, %v420
    %v424 = vxor.u32 %v423, 2147483648
    %v425 = vsel %vm304, %v424, %v423
    %v426 = vsub.s32 4, %v402
    %v427 = vsel %vm304, %v426, %v402
    %v428 = vsel %vm303, %v146, %v425
    %v429 = vsel %vm303, 0, %v427
    %v430 = vmul.f32 %v428, %v428
    %v431 = vmul.f32 %v430, -0.001358992
    %v432 = vadd.f32 %v431, 0.041655596
    %v433 = vmul.f32 %v430, %v432
    %v434 = vadd.f32 %v433, -0.4999988
    %v435 = vmul.f32 %v430, %v434
    %v436 = vadd.f32 1.0, %v435
    %v437 = vmul.f32 %v428, %v428
    %v438 = vmul.f32 %v437, -0.00019511016
    %v439 = vadd.f32 %v438, 0.008332121
    %v440 = vmul.f32 %v437, %v439
    %v441 = vadd.f32 %v440, -0.16666654
    %v442 = vmul.f32 %v437, %v441
    %v443 = vadd.f32 %v442, 1.0
    %v444 = vmul.f32 %v443, %v428
    %vm445 = vweird.f32 %v146
    %v446 = vadd.s32 %v429, 3
    %v447 = vand.u32 %v446, 3
    %vm448 = vcmp.lt.s32.totalorder %v447, 2
    %vm449 = vcmp.eq.s32.totalorder %v447, 0
    %v450 = vxor.u32 %v444, 2147483648
    %v451 = vsel %vm449, %v436, %v450
    %vm452 = vcmp.eq.s32.totalorder %v447, 2
    %v453 = vxor.u32 %v436, 2147483648
    %v454 = vsel %vm452, %v453, %v444
    %v455 = vsel %vm448, %v451, %v454
    %v456 = vsel %vm445, nan, %v455
    %v457 = vand.u32 2147483647, %v145
    %vm458 = vcmp.le.f32.partialorder %v457, 0.7853982
    %vm459 = vcmp.lt.s32.totalorder %v145, 0
    %v460 = vand.u32 %v145, 2139095040
    %v461 = vshrl.u32 %v460, 23
    %v462 = vsub.s32 %v461, 127
    %v463 = vand.u32 2147483647, %v145
    %v464 = vand.u32 %v463, 8388607
    %v465 = vor.u32 %v464, 8388608
    %v466 = vsub.s32 0, %v465
    %v467 = vadd.s32 %v462, 1
    %vm468 = vcmp.gt.s32.totalorder %v467, 0
    %v469 = vsel %vm468, %v467, 0
    %v470 = vshrl.u32 %v469, 5
    %v471 = vand.u32 %v469, 31
    %v472 = vsub.s32 32, %v471
    %v473 = vshrl.u32 683565275, %v472
    %v474 = vshll.u32 683565275, %v471
    %v475 = vshrl.u32 2475754826, %v472
    %v476 = vor.u32 %v474, %v475
    %v477 = vshll.u32 2475754826, %v471
    %v478 = vshrl.u32 2131351028, %v472
    %v479 = vor.u32 %v477, %v478
    %v480 = vshll.u32 2131351028, %v471
    %v481 = vshrl.u32 2102212464, %v472
    %v482 = vor.u32 %v480, %v481
    %v483 = vshll.u32 2102212464, %v471
    %v484 = vshrl.u32 920167782, %v472
    %v485 = vor.u32 %v483, %v484
    %v486 = vshll.u32 920167782, %v471
    %v487 = vshrl.u32 1326507024, %v472
    %v488 = vor.u32 %v486, %v487
    %vm489 = vcmp.lt.s32.totalorder %v470, 1
    %vm490 = vcmp.lt.s32.totalorder %v470, 2
    %vm491 = vcmp.lt.s32.totalorder %v470, 3
    %vm492 = vcmp.lt.s32.totalorder %v470, 4
    %v493 = vsel %vm489, %v473, %v476
    %v494 = vsel %vm492, %v482, 2102212464
    %v495 = vsel %vm491, %v479, %v494
    %v496 = vsel %vm490, %v493, %v495
    %v497 = vsel %vm489, %v476, %v479
    %v498 = vsel %vm492, %v485, 920167782
    %v499 = vsel %vm491, %v482, %v498
    %v500 = vsel %vm490, %v497, %v499
    %v501 = vsel %vm489, %v479, %v482
    %v502 = vsel %vm492, %v488, 1326507024
    %v503 = vsel %vm491, %v485, %v502
    %v504 = vsel %vm490, %v501, %v503
    %v505 = vshll.u32 %v465, 8
    %v506 = vand.u32 %v505, 65535
    %v507 = vshrl.u32 %v505, 16
    %v508 = vand.u32 %v504, 65535
    %v509 = vshrl.u32 %v504, 16
    %v510 = vmul.u32 %v506, %v508
    %v511 = vmul.u32 %v506, %v509
    %v512 = vmul.u32 %v507, %v508
    %v513 = vmul.u32 %v507, %v509
    %v514 = vshll.u32 %v511, 16
    %v515 = vshrl.u32 %v511, 16
    %v516 = vshll.u32 %v512, 16
    %v517 = vshrl.u32 %v512, 16
    %vm518 = vc.u32 %v510, %v514
    %v519 = vsel %vm518, 1, 0
    %v520 = vadd.s32 %v510, %v514
    %v521 = vadd.s32 %v513, %v519
    %vm522 = vc.u32 %v520, %v516
    %v523 = vsel %vm522, 1, 0
    %v524 = vadd.s32 %v520, %v516
    %v525 = vadd.s32 %v521, %v523
    %v526 = vadd.s32 %v525, %v515
    %v527 = vadd.s32 %v526, %v517
    %v528 = vand.u32 %v505, 65535
    %v529 = vshrl.u32 %v505, 16
    %v530 = vand.u32 %v500, 65535
    %v531 = vshrl.u32 %v500, 16
    %v532 = vmul.u32 %v528, %v530
    %v533 = vmul.u32 %v528, %v531
    %v534 = vmul.u32 %v529, %v530
    %v535 = vmul.u32 %v529, %v531
    %v536 = vshll.u32 %v533, 16
    %v537 = vshrl.u32 %v533, 16
    %v538 = vshll.u32 %v534, 16
    %v539 = vshrl.u32 %v534, 16
    %vm540 = vc.u32 %v532, %v536
    %v541 = vsel %vm540, 1, 0
    %v542 = vadd.s32 %v532, %v536
    %v543 = vadd.s32 %v535, %v541
    %vm544 = vc.u32 %v542, %v538
    %v545 = vsel %vm544, 1, 0
    %v546 = vadd.s32 %v542, %v538
    %v547 = vadd.s32 %v543, %v545
    %v548 = vadd.s32 %v547, %v537
    %v549 = vadd.s32 %v548, %v539
    %v550 = vmul.u32 %v505, %v496
    %v551 = vadd.s32 %v527, %v546
    %vm552 = vc.u32 %v527, %v546
    %v553 = vadd.s32 %v549, 1
    %v554 = vsel %vm552, %v553, %v549
    %v555 = vadd.s32 %v550, %v554
    %v556 = vadd.s32 %v555, 536870912
    %v557 = vshrl.u32 %v556, 30
    %v558 = vshll.u32 %v557, 30
    %v559 = vsub.s32 %v555, %v558
    %vm560 = vcmp.lt.s32.totalorder %v559, 0
    %v561 = vsub.s32 0, %v559
    %v562 = vsel %vm560, %v561, %v559
    %v563 = vclz %v562
    %v564 = vsub.s32 %v563, 2
    %vm565 = vcmp.gt.s32.totalorder 0, %v564
    %v566 = vsel %vm565, 0, %v564
    %v567 = vsub.s32 32, %v566
    %v568 = vshll.u32 %v559, %v566
    %v569 = vshrl.u32 %v551, %v567
    %v570 = vor.u32 %v568, %v569
    %v571 = vsub.s32 4294967266, %v566
    %v572 = vadd.s32 %v571, 127
    %v573 = vshll.u32 %v572, 23
    %v574 = vor.u32 4788187, %v573
    %v575 = vand.u32 2147483647, %v574
    %v577 = vcvt.s32.f32 %v570
    %v578 = vmul.f32 %v577, %v575
    %v579 = vxor.u32 %v578, 2147483648
    %v580 = vsel %vm459, %v579, %v578
    %v581 = vsub.s32 4, %v557
    %v582 = vsel %vm459, %v581, %v557
    %v583 = vsel %vm458, %v145, %v580
    %v584 = vsel %vm458, 0, %v582
    %v585 = vmul.f32 %v583, %v583
    %v586 = vmul.f32 %v585, -0.001358992
    %v587 = vadd.f32 %v586, 0.041655596
    %v588 = vmul.f32 %v585, %v587
    %v589 = vadd.f32 %v588, -0.4999988
    %v590 = vmul.f32 %v585, %v589
    %v591 = vadd.f32 1.0, %v590
    %v592 = vmul.f32 %v583, %v583
    %v593 = vmul.f32 %v592, -0.00019511016
    %v594 = vadd.f32 %v593, 0.008332121
    %v595 = vmul.f32 %v592, %v594
    %v596 = vadd.f32 %v595, -0.16666654
    %v597 = vmul.f32 %v592, %v596
    %v598 = vadd.f32 %v597, 1.0
    %v599 = vmul.f32 %v598, %v583
    %vm600 = vweird.f32 %v145
    %v601 = vand.u32 %v584, 3
    %vm602 = vcmp.lt.s32.totalorder %v601, 2
    %vm603 = vcmp.eq.s32.totalorder %v601, 0
    %v604 = vxor.u32 %v599, 2147483648
    %v605 = vsel %vm603, %v591, %v604
    %vm606 = vcmp.eq.s32.totalorder %v601, 2
    %v607 = vxor.u32 %v591, 2147483648
    %v608 = vsel %vm606, %v607, %v599
    %v609 = vsel %vm602, %v605, %v608
    %v610 = vsel %vm600, nan, %v609
    %v611 = vand.u32 2147483647, %v146
    %vm612 = vcmp.le.f32.partialorder %v611, 0.7853982
    %vm613 = vcmp.lt.s32.totalorder %v146, 0
    %v614 = vand.u32 %v146, 2139095040
    %v615 = vshrl.u32 %v614, 23
    %v616 = vsub.s32 %v615, 127
    %v617 = vand.u32 2147483647, %v146
    %v618 = vand.u32 %v617, 8388607
    %v619 = vor.u32 %v618, 8388608
    %v620 = vsub.s32 0, %v619
    %v621 = vadd.s32 %v616, 1
    %vm622 = vcmp.gt.s32.totalorder %v621, 0
    %v623 = vsel %vm622, %v621, 0
    %v624 = vshrl.u32 %v623, 5
    %v625 = vand.u32 %v623, 31
    %v626 = vsub.s32 32, %v625
    %v627 = vshrl.u32 683565275, %v626
    %v628 = vshll.u32 683565275, %v625
    %v629 = vshrl.u32 2475754826, %v626
    %v630 = vor.u32 %v628, %v629
    %v631 = vshll.u32 2475754826, %v625
    %v632 = vshrl.u32 2131351028, %v626
    %v633 = vor.u32 %v631, %v632
    %v634 = vshll.u32 2131351028, %v625
    %v635 = vshrl.u32 2102212464, %v626
    %v636 = vor.u32 %v634, %v635
    %v637 = vshll.u32 2102212464, %v625
    %v638 = vshrl.u32 920167782, %v626
    %v639 = vor.u32 %v637, %v638
    %v640 = vshll.u32 920167782, %v625
    %v641 = vshrl.u32 1326507024, %v626
    %v642 = vor.u32 %v640, %v641
    %vm643 = vcmp.lt.s32.totalorder %v624, 1
    %vm644 = vcmp.lt.s32.totalorder %v624, 2
    %vm645 = vcmp.lt.s32.totalorder %v624, 3
    %vm646 = vcmp.lt.s32.totalorder %v624, 4
    %v647 = vsel %vm643, %v627, %v630
    %v648 = vsel %vm646, %v636, 2102212464
    %v649 = vsel %vm645, %v633, %v648
    %v650 = vsel %vm644, %v647, %v649
    %v651 = vsel %vm643, %v630, %v633
    %v652 = vsel %vm646, %v639, 920167782
    %v653 = vsel %vm645, %v636, %v652
    %v654 = vsel %vm644, %v651, %v653
    %v655 = vsel %vm643, %v633, %v636
    %v656 = vsel %vm646, %v642, 1326507024
    %v657 = vsel %vm645, %v639, %v656
    %v658 = vsel %vm644, %v655, %v657
    %v659 = vshll.u32 %v619, 8
    %v660 = vand.u32 %v659, 65535
    %v661 = vshrl.u32 %v659, 16
    %v662 = vand.u32 %v658, 65535
    %v663 = vshrl.u32 %v658, 16
    %v664 = vmul.u32 %v660, %v662
    %v665 = vmul.u32 %v660, %v663
    %v666 = vmul.u32 %v661, %v662
    %v667 = vmul.u32 %v661, %v663
    %v668 = vshll.u32 %v665, 16
    %v669 = vshrl.u32 %v665, 16
    %v670 = vshll.u32 %v666, 16
    %v671 = vshrl.u32 %v666, 16
    %vm672 = vc.u32 %v664, %v668
    %v673 = vsel %vm672, 1, 0
    %v674 = vadd.s32 %v664, %v668
    %v675 = vadd.s32 %v667, %v673
    %vm676 = vc.u32 %v674, %v670
    %v677 = vsel %vm676, 1, 0
    %v678 = vadd.s32 %v674, %v670
    %v679 = vadd.s32 %v675, %v677
    %v680 = vadd.s32 %v679, %v669
    %v681 = vadd.s32 %v680, %v671
    %v682 = vand.u32 %v659, 65535
    %v683 = vshrl.u32 %v659, 16
    %v684 = vand.u32 %v654, 65535
    %v685 = vshrl.u32 %v654, 16
    %v686 = vmul.u32 %v682, %v684
    %v687 = vmul.u32 %v682, %v685
    %v688 = vmul.u32 %v683, %v684
    %v689 = vmul.u32 %v683, %v685
    %v690 = vshll.u32 %v687, 16
    %v691 = vshrl.u32 %v687, 16
    %v692 = vshll.u32 %v688, 16
    %v693 = vshrl.u32 %v688, 16
    %vm694 = vc.u32 %v686, %v690
    %v695 = vsel %vm694, 1, 0
    %v696 = vadd.s32 %v686, %v690
    %v697 = vadd.s32 %v689, %v695
    %vm698 = vc.u32 %v696, %v692
    %v699 = vsel %vm698, 1, 0
    %v700 = vadd.s32 %v696, %v692
    %v701 = vadd.s32 %v697, %v699
    %v702 = vadd.s32 %v701, %v691
    %v703 = vadd.s32 %v702, %v693
    %v704 = vmul.u32 %v659, %v650
    %v705 = vadd.s32 %v681, %v700
    %vm706 = vc.u32 %v681, %v700
    %v707 = vadd.s32 %v703, 1
    %v708 = vsel %vm706, %v707, %v703
    %v709 = vadd.s32 %v704, %v708
    %v710 = vadd.s32 %v709, 536870912
    %v711 = vshrl.u32 %v710, 30
    %v712 = vshll.u32 %v711, 30
    %v713 = vsub.s32 %v709, %v712
    %vm714 = vcmp.lt.s32.totalorder %v713, 0
    %v715 = vsub.s32 0, %v713
    %v716 = vsel %vm714, %v715, %v713
    %v717 = vclz %v716
    %v718 = vsub.s32 %v717, 2
    %vm719 = vcmp.gt.s32.totalorder 0, %v718
    %v720 = vsel %vm719, 0, %v718
    %v721 = vsub.s32 32, %v720
    %v722 = vshll.u32 %v713, %v720
    %v723 = vshrl.u32 %v705, %v721
    %v724 = vor.u32 %v722, %v723
    %v725 = vsub.s32 4294967266, %v720
    %v726 = vadd.s32 %v725, 127
    %v727 = vshll.u32 %v726, 23
    %v728 = vor.u32 4788187, %v727
    %v729 = vand.u32 2147483647, %v728
    %v731 = vcvt.s32.f32 %v724
    %v732 = vmul.f32 %v731, %v729
    %v733 = vxor.u32 %v732, 2147483648
    %v734 = vsel %vm613, %v733, %v732
    %v735 = vsub.s32 4, %v711
    %v736 = vsel %vm613, %v735, %v711
    %v737 = vsel %vm612, %v146, %v734
    %v738 = vsel %vm612, 0, %v736
    %v739 = vmul.f32 %v737, %v737
    %v740 = vmul.f32 %v739, -0.001358992
    %v741 = vadd.f32 %v740, 0.041655596
    %v742 = vmul.f32 %v739, %v741
    %v743 = vadd.f32 %v742, -0.4999988
    %v744 = vmul.f32 %v739, %v743
    %v745 = vadd.f32 1.0, %v744
    %v746 = vmul.f32 %v737, %v737
    %v747 = vmul.f32 %v746, -0.00019511016
    %v748 = vadd.f32 %v747, 0.008332121
    %v749 = vmul.f32 %v746, %v748
    %v750 = vadd.f32 %v749, -0.16666654
    %v751 = vmul.f32 %v746, %v750
    %v752 = vadd.f32 %v751, 1.0
    %v753 = vmul.f32 %v752, %v737
    %vm754 = vweird.f32 %v146
    %v755 = vand.u32 %v738, 3
    %vm756 = vcmp.lt.s32.totalorder %v755, 2
    %vm757 = vcmp.eq.s32.totalorder %v755, 0
    %v758 = vxor.u32 %v753, 2147483648
    %v759 = vsel %vm757, %v745, %v758
    %vm760 = vcmp.eq.s32.totalorder %v755, 2
    %v761 = vxor.u32 %v745, 2147483648
    %v762 = vsel %vm760, %v761, %v753
    %v763 = vsel %vm756, %v759, %v762
    %v764 = vsel %vm754, nan, %v763
    %767 = vrot.lane.b32.xlu0 %v610, 64
    %v768 = vpop.permute.xlu0 %767
    %769 = vrot.lane.b32.xlu0 %v764, 64
    %v770 = vpop.permute.xlu0 %769
    %vm773 = vcmask 523264
    %v774 = vsel %vm773, %v301, %v768
    %v775 = vsel %vm773, %v456, %v770
    %v776 = vld [vmem:[%s0] sm:$0xff]
    %v777 = vld [vmem:[%s0 + $0x8] sm:$0xff]
    %v778 = vld [vmem:[%s8] sm:$0xff]
    %v779 = vld [vmem:[%s8 + $0x8] sm:$0xff]
    %v780 = vld [vmem:[#allocation2] sm:$0xff]
    %v781 = vld [vmem:[#allocation2 + $0x8] sm:$0xff]
    %v782 = vld [vmem:[#allocation2 + $0x10] sm:$0xff]
    %v783 = vld [vmem:[#allocation2 + $0x18] sm:$0xff]
    %v784 = vld [vmem:[#allocation2 + $0x20] sm:$0xff]
    %v785 = vld [vmem:[#allocation2 + $0x28] sm:$0xff]
    %v786 = vld [vmem:[#allocation2 + $0x30] sm:$0xff]
    %v787 = vld [vmem:[#allocation2 + $0x38] sm:$0xff]
    %v788 = vld [vmem:[#allocation2 + $0x40] sm:$0xff]
    %v789 = vld [vmem:[#allocation2 + $0x48] sm:$0xff]
    %v790 = vld [vmem:[#allocation2 + $0x50] sm:$0xff]
    %v791 = vld [vmem:[#allocation2 + $0x58] sm:$0xff]
    %v792 = vld [vmem:[#allocation2 + $0x60] sm:$0xff]
    %v793 = vld [vmem:[#allocation2 + $0x68] sm:$0xff]
    %v794 = vld [vmem:[#allocation2 + $0x70] sm:$0xff]
    %v795 = vld [vmem:[#allocation2 + $0x78] sm:$0xff]
    %796 = vmatpush.msra.mxu0 %v795
    %797 = vmatpush.msra.mxu0 %v794
    %798 = vmatpush.msra.mxu0 %v793
    %799 = vmatpush.msra.mxu0 %v792
    %800 = vmatpush.msra.mxu0 %v791
    %801 = vmatpush.msra.mxu0 %v790
    %802 = vmatpush.msra.mxu0 %v789
    %803 = vmatpush.msra.mxu0 %v788
    %804 = vmatpush.msra.mxu0 %v787
    %805 = vmatpush.msra.mxu0 %v786
    %806 = vmatpush.msra.mxu0 %v785
    %807 = vmatpush.msra.mxu0 %v784
    %808 = vmatpush.msra.mxu0 %v783
    %809 = vmatpush.msra.mxu0 %v782
    %810 = vmatpush.msra.mxu0 %v781
    %811 = vmatpush.msra.mxu0 %v780
    %812 = vmatmul.f32.gmra.mxu0 %v774
    %v813 = vpop.f32.mrf.mxu0
    %v814 = vadd.f32 0.0, %v813
    %815 = vmatmul.f32.gmra.mxu0 %v775
    %v816 = vpop.f32.mrf.mxu0
    %v817 = vadd.f32 0.0, %v816
    %818 = vdwg.mxu0
    %vm819 = vcmask 130048
    %v821 = vsel %vm819, %v776, 0
    %v824 = vsel %vm819, %v777, 0
    %826 = vmatpush.msra.mxu0 0.0
    %827 = vmatpush.msra.mxu0 0.0
    %828 = vmatpush.msra.mxu0 0.0
    %829 = vmatpush.msra.mxu0 0.0
    %830 = vmatpush.msra.mxu0 0.0
    %831 = vmatpush.msra.mxu0 0.0
    %832 = vmatpush.msra.mxu0 0.0
    %833 = vmatpush.msra.mxu0 0.0
    %834 = vmatpush.msra.mxu0 0.0
    %835 = vmatpush.msra.mxu0 0.0
    %836 = vmatpush.msra.mxu0 0.0
    %837 = vmatpush.msra.mxu0 0.0
    %838 = vmatpush.msra.mxu0 0.0
    %839 = vmatpush.msra.mxu0 0.0
    %840 = vmatpush.msra.mxu0 %v779
    %841 = vmatpush.msra.mxu0 %v778
    %842 = vmatmul.f32.gmra.mxu0 %v821
    %v843 = vpop.f32.mrf.mxu0
    %v844 = vadd.f32 %v814, %v843
    %845 = vmatmul.f32.gmra.mxu0 %v824
    %v846 = vpop.f32.mrf.mxu0
    %v847 = vadd.f32 %v817, %v846
    %848 = vdwg.mxu0
    %v849 = vld [vmem:[%s11] sm:$0x1]
    %v851 = vperm.slane %v849, 0
    %v853 = vadd.f32 %v844, %v851
    %v854 = vadd.f32 %v847, %v851
    %v855 = vld [vmem:[%s3] sm:$0xff]
    %v856 = vld [vmem:[%s3 + $0x8] sm:$0xff]
    %v857 = vld [vmem:[%s4] sm:$0x1]
    %v858 = vld [vmem:[%s5] sm:$0x1]
    %v860 = vperm.slane %v858, 0
    %vm862 = vcmask 7168
    %v864 = vsel %vm862, %v855, 0
    %v867 = vsel %vm862, %v856, 0
    %vm869 = vcmask 1040384
    %v871 = vsel %vm869, %v857, 0
    %873 = vmatpush.msra.mxu0 0.0
    %874 = vmatpush.msra.mxu0 0.0
    %875 = vmatpush.msra.mxu0 0.0
    %876 = vmatpush.msra.mxu0 0.0
    %877 = vmatpush.msra.mxu0 0.0
    %878 = vmatpush.msra.mxu0 0.0
    %879 = vmatpush.msra.mxu0 0.0
    %880 = vmatpush.msra.mxu0 0.0
    %881 = vmatpush.msra.mxu0 0.0
    %882 = vmatpush.msra.mxu0 0.0
    %883 = vmatpush.msra.mxu0 0.0
    %884 = vmatpush.msra.mxu0 0.0
    %885 = vmatpush.msra.mxu0 0.0
    %886 = vmatpush.msra.mxu0 0.0
    %887 = vmatpush.msra.mxu0 0.0
    %888 = vmatpush.msra.mxu0 %v871
    %889 = vmatmul.f32.gmra.mxu0 %v864
    %v890 = vpop.f32.mrf.mxu0
    %v891 = vadd.f32 %v860, %v890
    %892 = vmatmul.f32.gmra.mxu0 %v867
    %v893 = vpop.f32.mrf.mxu0
    %v894 = vadd.f32 %v860, %v893
    %895 = vdwg.mxu0
    %v896 = vmul.f32 %v891, 0.5
    %v897 = vmul.f32 %v894, 0.5
    %v898 = vmul.f32 %v891, 0.70710677
    %v899 = vmul.f32 %v894, 0.70710677
    %v900 = vmul.f32 %v898, %v898
    %v901 = vmin.f32 16.0, %v900
    %v902 = vmul.f32 %v901, 2.1237322e-06
    %v903 = vadd.f32 %v902, 0.00028619796
    %v904 = vmul.f32 %v901, %v903
    %v905 = vadd.f32 %v904, 0.0036580483
    %v906 = vmul.f32 %v901, %v905
    %v907 = vadd.f32 %v906, 0.05243302
    %v908 = vmul.f32 %v901, %v907
    %v909 = vadd.f32 %v908, 0.18741608
    %v910 = vmul.f32 %v901, %v909
    %v911 = vadd.f32 %v910, 1.1283791
    %v912 = vmul.f32 %v898, %v911
    %v913 = vmul.f32 %v901, 3.8918573e-05
    %v914 = vadd.f32 %v913, 0.001143296
    %v915 = vmul.f32 %v901, %v914
    %v916 = vadd.f32 %v915, 0.014752088
    %v917 = vmul.f32 %v901, %v916
    %v918 = vadd.f32 %v917, 0.112945676
    %v919 = vmul.f32 %v901, %v918
    %v920 = vadd.f32 %v919, 0.4994258
    %v921 = vmul.f32 %v901, %v920
    %v922 = vadd.f32 %v921, 1.0
    %v923 = vrcp.pop %v922
    %v924 = vmul.f32 %v922, %v923
    %v925 = vsub.f32 1.0, %v924
    %v926 = vmul.f32 %v923, %v925
    %v927 = vadd.f32 %v923, %v926
    %vm928 = vweird.f32 %v922
    %vm929 = vweird.f32 %v923
    %vm930 = vmor %vm928, %vm929
    %v931 = vsel %vm930, %v923, %v927
    %v932 = vand.u32 2147483647, %v922
    %vm933 = vcmp.eq.f32.partialorder %v932, 8.507059e+37
    %v934 = vand.u32 %v922, 2147483648
    %v935 = vor.u32 1.1754944e-38, %v934
    %v936 = vsel %vm933, %v935, %v931
    %v937 = vmul.f32 %v912, %v936
    %v938 = vmin.f32 %v937, 1.0
    %v939 = vmax.f32 %v938, -1.0
    %v940 = vmul.f32 %v899, %v899
    %v941 = vmin.f32 16.0, %v940
    %v942 = vmul.f32 %v941, 2.1237322e-06
    %v943 = vadd.f32 %v942, 0.00028619796
    %v944 = vmul.f32 %v941, %v943
    %v945 = vadd.f32 %v944, 0.0036580483
    %v946 = vmul.f32 %v941, %v945
    %v947 = vadd.f32 %v946, 0.05243302
    %v948 = vmul.f32 %v941, %v947
    %v949 = vadd.f32 %v948, 0.18741608
    %v950 = vmul.f32 %v941, %v949
    %v951 = vadd.f32 %v950, 1.1283791
    %v952 = vmul.f32 %v899, %v951
    %v953 = vmul.f32 %v941, 3.8918573e-05
    %v954 = vadd.f32 %v953, 0.001143296
    %v955 = vmul.f32 %v941, %v954
    %v956 = vadd.f32 %v955, 0.014752088
    %v957 = vmul.f32 %v941, %v956
    %v958 = vadd.f32 %v957, 0.112945676
    %v959 = vmul.f32 %v941, %v958
    %v960 = vadd.f32 %v959, 0.4994258
    %v961 = vmul.f32 %v941, %v960
    %v962 = vadd.f32 %v961, 1.0
    %v963 = vrcp.pop %v962
    %v964 = vmul.f32 %v962, %v963
    %v965 = vsub.f32 1.0, %v964
    %v966 = vmul.f32 %v963, %v965
    %v967 = vadd.f32 %v963, %v966
    %vm968 = vweird.f32 %v962
    %vm969 = vweird.f32 %v963
    %vm970 = vmor %vm968, %vm969
    %v971 = vsel %vm970, %v963, %v967
    %v972 = vand.u32 2147483647, %v962
    %vm973 = vcmp.eq.f32.partialorder %v972, 8.507059e+37
    %v974 = vand.u32 %v962, 2147483648
    %v975 = vor.u32 1.1754944e-38, %v974
    %v976 = vsel %vm973, %v975, %v971
    %v977 = vmul.f32 %v952, %v976
    %v978 = vmin.f32 %v977, 1.0
    %v979 = vmax.f32 %v978, -1.0
    %v980 = vadd.f32 %v939, 1.0
    %v981 = vadd.f32 %v979, 1.0
    %v982 = vmul.f32 %v896, %v980
    %v983 = vmul.f32 %v897, %v981
    %v984 = vld [vmem:[%s6] sm:$0xff]
    %v985 = vld [vmem:[%s6 + $0x8] sm:$0xff]
    %v986 = vld [vmem:[%s6 + $0x10] sm:$0xff]
    %v987 = vld [vmem:[%s6 + $0x18] sm:$0xff]
    %v988 = vld [vmem:[%s6 + $0x20] sm:$0xff]
    %v989 = vld [vmem:[%s6 + $0x28] sm:$0xff]
    %v990 = vld [vmem:[%s6 + $0x30] sm:$0xff]
    %v991 = vld [vmem:[%s6 + $0x38] sm:$0xff]
    %v992 = vld [vmem:[%s6 + $0x40] sm:$0xff]
    %v993 = vld [vmem:[%s6 + $0x48] sm:$0xff]
    %v994 = vld [vmem:[%s6 + $0x50] sm:$0xff]
    %v995 = vld [vmem:[%s6 + $0x58] sm:$0xff]
    %v996 = vld [vmem:[%s6 + $0x60] sm:$0xff]
    %v997 = vld [vmem:[%s6 + $0x68] sm:$0xff]
    %v998 = vld [vmem:[%s6 + $0x70] sm:$0xff]
    %v999 = vld [vmem:[%s6 + $0x78] sm:$0xff]
    %v1000 = vld [vmem:[%s7] sm:$0x1]
    %v1002 = vperm.slane %v1000, 0
    %1004 = vmatpush.msra.mxu0 %v999
    %1005 = vmatpush.msra.mxu0 %v998
    %1006 = vmatpush.msra.mxu0 %v997
    %1007 = vmatpush.msra.mxu0 %v996
    %1008 = vmatpush.msra.mxu0 %v995
    %1009 = vmatpush.msra.mxu0 %v994
    %1010 = vmatpush.msra.mxu0 %v993
    %1011 = vmatpush.msra.mxu0 %v992
    %1012 = vmatpush.msra.mxu0 %v991
    %1013 = vmatpush.msra.mxu0 %v990
    %1014 = vmatpush.msra.mxu0 %v989
    %1015 = vmatpush.msra.mxu0 %v988
    %1016 = vmatpush.msra.mxu0 %v987
    %1017 = vmatpush.msra.mxu0 %v986
    %1018 = vmatpush.msra.mxu0 %v985
    %1019 = vmatpush.msra.mxu0 %v984
    %1020 = vmatmul.f32.gmra.mxu0 %v982
    %v1021 = vpop.f32.mrf.mxu0
    %v1022 = vadd.f32 %v1002, %v1021
    %1023 = vmatmul.f32.gmra.mxu0 %v983
    %v1024 = vpop.f32.mrf.mxu0
    %v1025 = vadd.f32 %v1002, %v1024
    %1026 = vdwg.mxu0
    %v1027 = vld [vmem:[#allocation5] sm:$0xff]
    %v1028 = vld [vmem:[#allocation5 + $0x8] sm:$0xff]
    %v1029 = vld [vmem:[#allocation5 + $0x10] sm:$0xff]
    %v1030 = vld [vmem:[#allocation5 + $0x18] sm:$0xff]
    %v1031 = vld [vmem:[#allocation5 + $0x20] sm:$0xff]
    %v1032 = vld [vmem:[#allocation5 + $0x28] sm:$0xff]
    %v1033 = vld [vmem:[#allocation5 + $0x30] sm:$0xff]
    %v1034 = vld [vmem:[#allocation5 + $0x38] sm:$0xff]
    %v1035 = vld [vmem:[#allocation5 + $0x40] sm:$0xff]
    %v1036 = vld [vmem:[#allocation5 + $0x48] sm:$0xff]
    %v1037 = vld [vmem:[#allocation5 + $0x50] sm:$0xff]
    %v1038 = vld [vmem:[#allocation5 + $0x58] sm:$0xff]
    %v1039 = vld [vmem:[#allocation5 + $0x60] sm:$0xff]
    %v1040 = vld [vmem:[#allocation5 + $0x68] sm:$0xff]
    %v1041 = vld [vmem:[#allocation5 + $0x70] sm:$0xff]
    %v1042 = vld [vmem:[#allocation5 + $0x78] sm:$0xff]
    %1043 = vmatpush.msra.mxu0 %v1042
    %1044 = vmatpush.msra.mxu0 %v1041
    %1045 = vmatpush.msra.mxu0 %v1040
    %1046 = vmatpush.msra.mxu0 %v1039
    %1047 = vmatpush.msra.mxu0 %v1038
    %1048 = vmatpush.msra.mxu0 %v1037
    %1049 = vmatpush.msra.mxu0 %v1036
    %1050 = vmatpush.msra.mxu0 %v1035
    %1051 = vmatpush.msra.mxu0 %v1034
    %1052 = vmatpush.msra.mxu0 %v1033
    %1053 = vmatpush.msra.mxu0 %v1032
    %1054 = vmatpush.msra.mxu0 %v1031
    %1055 = vmatpush.msra.mxu0 %v1030
    %1056 = vmatpush.msra.mxu0 %v1029
    %1057 = vmatpush.msra.mxu0 %v1028
    %1058 = vmatpush.msra.mxu0 %v1027
    %1059 = vmatmul.f32.gmra.mxu0 %v1022
    %v1060 = vpop.f32.mrf.mxu0
    %v1061 = vadd.f32 0.0, %v1060
    %1062 = vmatmul.f32.gmra.mxu0 %v1025
    %v1063 = vpop.f32.mrf.mxu0
    %v1064 = vadd.f32 0.0, %v1063
    %1065 = vdwg.mxu0
    %v1066 = vadd.f32 %v853, %v1061
    %v1067 = vadd.f32 %v854, %v1064
    %v1068 = vmul.f32 %v1066, 0.5
    %v1069 = vmul.f32 %v1067, 0.5
    %v1070 = vmul.f32 %v1066, 0.70710677
    %v1071 = vmul.f32 %v1067, 0.70710677
    %v1072 = vmul.f32 %v1070, %v1070
    %v1073 = vmin.f32 16.0, %v1072
    %v1074 = vmul.f32 %v1073, 2.1237322e-06
    %v1075 = vadd.f32 %v1074, 0.00028619796
    %v1076 = vmul.f32 %v1073, %v1075
    %v1077 = vadd.f32 %v1076, 0.0036580483
    %v1078 = vmul.f32 %v1073, %v1077
    %v1079 = vadd.f32 %v1078, 0.05243302
    %v1080 = vmul.f32 %v1073, %v1079
    %v1081 = vadd.f32 %v1080, 0.18741608
    %v1082 = vmul.f32 %v1073, %v1081
    %v1083 = vadd.f32 %v1082, 1.1283791
    %v1084 = vmul.f32 %v1070, %v1083
    %v1085 = vmul.f32 %v1073, 3.8918573e-05
    %v1086 = vadd.f32 %v1085, 0.001143296
    %v1087 = vmul.f32 %v1073, %v1086
    %v1088 = vadd.f32 %v1087, 0.014752088
    %v1089 = vmul.f32 %v1073, %v1088
    %v1090 = vadd.f32 %v1089, 0.112945676
    %v1091 = vmul.f32 %v1073, %v1090
    %v1092 = vadd.f32 %v1091, 0.4994258
    %v1093 = vmul.f32 %v1073, %v1092
    %v1094 = vadd.f32 %v1093, 1.0
    %v1095 = vrcp.pop %v1094
    %v1096 = vmul.f32 %v1094, %v1095
    %v1097 = vsub.f32 1.0, %v1096
    %v1098 = vmul.f32 %v1095, %v1097
    %v1099 = vadd.f32 %v1095, %v1098
    %vm1100 = vweird.f32 %v1094
    %vm1101 = vweird.f32 %v1095
    %vm1102 = vmor %vm1100, %vm1101
    %v1103 = vsel %vm1102, %v1095, %v1099
    %v1104 = vand.u32 2147483647, %v1094
    %vm1105 = vcmp.eq.f32.partialorder %v1104, 8.507059e+37
    %v1106 = vand.u32 %v1094, 2147483648
    %v1107 = vor.u32 1.1754944e-38, %v1106
    %v1108 = vsel %vm1105, %v1107, %v1103
    %v1109 = vmul.f32 %v1084, %v1108
    %v1110 = vmin.f32 %v1109, 1.0
    %v1111 = vmax.f32 %v1110, -1.0
    %v1112 = vmul.f32 %v1071, %v1071
    %v1113 = vmin.f32 16.0, %v1112
    %v1114 = vmul.f32 %v1113, 2.1237322e-06
    %v1115 = vadd.f32 %v1114, 0.00028619796
    %v1116 = vmul.f32 %v1113, %v1115
    %v1117 = vadd.f32 %v1116, 0.0036580483
    %v1118 = vmul.f32 %v1113, %v1117
    %v1119 = vadd.f32 %v1118, 0.05243302
    %v1120 = vmul.f32 %v1113, %v1119
    %v1121 = vadd.f32 %v1120, 0.18741608
    %v1122 = vmul.f32 %v1113, %v1121
    %v1123 = vadd.f32 %v1122, 1.1283791
    %v1124 = vmul.f32 %v1071, %v1123
    %v1125 = vmul.f32 %v1113, 3.8918573e-05
    %v1126 = vadd.f32 %v1125, 0.001143296
    %v1127 = vmul.f32 %v1113, %v1126
    %v1128 = vadd.f32 %v1127, 0.014752088
    %v1129 = vmul.f32 %v1113, %v1128
    %v1130 = vadd.f32 %v1129, 0.112945676
    %v1131 = vmul.f32 %v1113, %v1130
    %v1132 = vadd.f32 %v1131, 0.4994258
    %v1133 = vmul.f32 %v1113, %v1132
    %v1134 = vadd.f32 %v1133, 1.0
    %v1135 = vrcp.pop %v1134
    %v1136 = vmul.f32 %v1134, %v1135
    %v1137 = vsub.f32 1.0, %v1136
    %v1138 = vmul.f32 %v1135, %v1137
    %v1139 = vadd.f32 %v1135, %v1138
    %vm1140 = vweird.f32 %v1134
    %vm1141 = vweird.f32 %v1135
    %vm1142 = vmor %vm1140, %vm1141
    %v1143 = vsel %vm1142, %v1135, %v1139
    %v1144 = vand.u32 2147483647, %v1134
    %vm1145 = vcmp.eq.f32.partialorder %v1144, 8.507059e+37
    %v1146 = vand.u32 %v1134, 2147483648
    %v1147 = vor.u32 1.1754944e-38, %v1146
    %v1148 = vsel %vm1145, %v1147, %v1143
    %v1149 = vmul.f32 %v1124, %v1148
    %v1150 = vmin.f32 %v1149, 1.0
    %v1151 = vmax.f32 %v1150, -1.0
    %v1152 = vadd.f32 %v1111, 1.0
    %v1153 = vadd.f32 %v1151, 1.0
    %v1154 = vmul.f32 %v1068, %v1152
    %v1155 = vmul.f32 %v1069, %v1153
    %v1156 = vld [vmem:[#allocation7] sm:$0xff]
    %v1157 = vld [vmem:[#allocation7 + $0x8] sm:$0xff]
    %v1158 = vld [vmem:[#allocation7 + $0x10] sm:$0xff]
    %v1159 = vld [vmem:[#allocation7 + $0x18] sm:$0xff]
    %v1160 = vld [vmem:[#allocation7 + $0x20] sm:$0xff]
    %v1161 = vld [vmem:[#allocation7 + $0x28] sm:$0xff]
    %v1162 = vld [vmem:[#allocation7 + $0x30] sm:$0xff]
    %v1163 = vld [vmem:[#allocation7 + $0x38] sm:$0xff]
    %v1164 = vld [vmem:[#allocation7 + $0x40] sm:$0xff]
    %v1165 = vld [vmem:[#allocation7 + $0x48] sm:$0xff]
    %v1166 = vld [vmem:[#allocation7 + $0x50] sm:$0xff]
    %v1167 = vld [vmem:[#allocation7 + $0x58] sm:$0xff]
    %v1168 = vld [vmem:[#allocation7 + $0x60] sm:$0xff]
    %v1169 = vld [vmem:[#allocation7 + $0x68] sm:$0xff]
    %v1170 = vld [vmem:[#allocation7 + $0x70] sm:$0xff]
    %v1171 = vld [vmem:[#allocation7 + $0x78] sm:$0xff]
    %v1172 = vld [vmem:[%s13] sm:$0x1]
    %v1174 = vperm.slane %v1172, 0
    %1176 = vmatpush.msra.mxu0 %v1171
    %1177 = vmatpush.msra.mxu0 %v1170
    %1178 = vmatpush.msra.mxu0 %v1169
    %1179 = vmatpush.msra.mxu0 %v1168
    %1180 = vmatpush.msra.mxu0 %v1167
    %1181 = vmatpush.msra.mxu0 %v1166
    %1182 = vmatpush.msra.mxu0 %v1165
    %1183 = vmatpush.msra.mxu0 %v1164
    %1184 = vmatpush.msra.mxu0 %v1163
    %1185 = vmatpush.msra.mxu0 %v1162
    %1186 = vmatpush.msra.mxu0 %v1161
    %1187 = vmatpush.msra.mxu0 %v1160
    %1188 = vmatpush.msra.mxu0 %v1159
    %1189 = vmatpush.msra.mxu0 %v1158
    %1190 = vmatpush.msra.mxu0 %v1157
    %1191 = vmatpush.msra.mxu0 %v1156
    %1192 = vmatmul.f32.gmra.mxu0 %v1154
    %v1193 = vpop.f32.mrf.mxu0
    %v1194 = vadd.f32 %v1174, %v1193
    %1195 = vmatmul.f32.gmra.mxu0 %v1155
    %v1196 = vpop.f32.mrf.mxu0
    %v1197 = vadd.f32 %v1174, %v1196
    %1198 = vdwg.mxu0
    %v1199 = vmul.f32 %v1194, 0.5
    %v1200 = vmul.f32 %v1197, 0.5
    %v1201 = vmul.f32 %v1194, 0.70710677
    %v1202 = vmul.f32 %v1197, 0.70710677
    %v1203 = vmul.f32 %v1201, %v1201
    %v1204 = vmin.f32 16.0, %v1203
    %v1205 = vmul.f32 %v1204, 2.1237322e-06
    %v1206 = vadd.f32 %v1205, 0.00028619796
    %v1207 = vmul.f32 %v1204, %v1206
    %v1208 = vadd.f32 %v1207, 0.0036580483
    %v1209 = vmul.f32 %v1204, %v1208
    %v1210 = vadd.f32 %v1209, 0.05243302
    %v1211 = vmul.f32 %v1204, %v1210
    %v1212 = vadd.f32 %v1211, 0.18741608
    %v1213 = vmul.f32 %v1204, %v1212
    %v1214 = vadd.f32 %v1213, 1.1283791
    %v1215 = vmul.f32 %v1201, %v1214
    %v1216 = vmul.f32 %v1204, 3.8918573e-05
    %v1217 = vadd.f32 %v1216, 0.001143296
    %v1218 = vmul.f32 %v1204, %v1217
    %v1219 = vadd.f32 %v1218, 0.014752088
    %v1220 = vmul.f32 %v1204, %v1219
    %v1221 = vadd.f32 %v1220, 0.112945676
    %v1222 = vmul.f32 %v1204, %v1221
    %v1223 = vadd.f32 %v1222, 0.4994258
    %v1224 = vmul.f32 %v1204, %v1223
    %v1225 = vadd.f32 %v1224, 1.0
    %v1226 = vrcp.pop %v1225
    %v1227 = vmul.f32 %v1225, %v1226
    %v1228 = vsub.f32 1.0, %v1227
    %v1229 = vmul.f32 %v1226, %v1228
    %v1230 = vadd.f32 %v1226, %v1229
    %vm1231 = vweird.f32 %v1225
    %vm1232 = vweird.f32 %v1226
    %vm1233 = vmor %vm1231, %vm1232
    %v1234 = vsel %vm1233, %v1226, %v1230
    %v1235 = vand.u32 2147483647, %v1225
    %vm1236 = vcmp.eq.f32.partialorder %v1235, 8.507059e+37
    %v1237 = vand.u32 %v1225, 2147483648
    %v1238 = vor.u32 1.1754944e-38, %v1237
    %v1239 = vsel %vm1236, %v1238, %v1234
    %v1240 = vmul.f32 %v1215, %v1239
    %v1241 = vmin.f32 %v1240, 1.0
    %v1242 = vmax.f32 %v1241, -1.0
    %v1243 = vmul.f32 %v1202, %v1202
    %v1244 = vmin.f32 16.0, %v1243
    %v1245 = vmul.f32 %v1244, 2.1237322e-06
    %v1246 = vadd.f32 %v1245, 0.00028619796
    %v1247 = vmul.f32 %v1244, %v1246
    %v1248 = vadd.f32 %v1247, 0.0036580483
    %v1249 = vmul.f32 %v1244, %v1248
    %v1250 = vadd.f32 %v1249, 0.05243302
    %v1251 = vmul.f32 %v1244, %v1250
    %v1252 = vadd.f32 %v1251, 0.18741608
    %v1253 = vmul.f32 %v1244, %v1252
    %v1254 = vadd.f32 %v1253, 1.1283791
    %v1255 = vmul.f32 %v1202, %v1254
    %v1256 = vmul.f32 %v1244, 3.8918573e-05
    %v1257 = vadd.f32 %v1256, 0.001143296
    %v1258 = vmul.f32 %v1244, %v1257
    %v1259 = vadd.f32 %v1258, 0.014752088
    %v1260 = vmul.f32 %v1244, %v1259
    %v1261 = vadd.f32 %v1260, 0.112945676
    %v1262 = vmul.f32 %v1244, %v1261
    %v1263 = vadd.f32 %v1262, 0.4994258
    %v1264 = vmul.f32 %v1244, %v1263
    %v1265 = vadd.f32 %v1264, 1.0
    %v1266 = vrcp.pop %v1265
    %v1267 = vmul.f32 %v1265, %v1266
    %v1268 = vsub.f32 1.0, %v1267
    %v1269 = vmul.f32 %v1266, %v1268
    %v1270 = vadd.f32 %v1266, %v1269
    %vm1271 = vweird.f32 %v1265
    %vm1272 = vweird.f32 %v1266
    %vm1273 = vmor %vm1271, %vm1272
    %v1274 = vsel %vm1273, %v1266, %v1270
    %v1275 = vand.u32 2147483647, %v1265
    %vm1276 = vcmp.eq.f32.partialorder %v1275, 8.507059e+37
    %v1277 = vand.u32 %v1265, 2147483648
    %v1278 = vor.u32 1.1754944e-38, %v1277
    %v1279 = vsel %vm1276, %v1278, %v1274
    %v1280 = vmul.f32 %v1255, %v1279
    %v1281 = vmin.f32 %v1280, 1.0
    %v1282 = vmax.f32 %v1281, -1.0
    %v1283 = vadd.f32 %v1242, 1.0
    %v1284 = vadd.f32 %v1282, 1.0
    %v1285 = vmul.f32 %v1199, %v1283
    %v1286 = vmul.f32 %v1200, %v1284
    %v1287 = vld [vmem:[#allocation8] sm:$0xff]
    %v1288 = vld [vmem:[#allocation8 + $0x8] sm:$0xff]
    %v1289 = vld [vmem:[#allocation8 + $0x10] sm:$0xff]
    %v1290 = vld [vmem:[#allocation8 + $0x18] sm:$0xff]
    %v1291 = vld [vmem:[#allocation8 + $0x20] sm:$0xff]
    %v1292 = vld [vmem:[#allocation8 + $0x28] sm:$0xff]
    %v1293 = vld [vmem:[#allocation8 + $0x30] sm:$0xff]
    %v1294 = vld [vmem:[#allocation8 + $0x38] sm:$0xff]
    %v1295 = vld [vmem:[#allocation8 + $0x40] sm:$0xff]
    %v1296 = vld [vmem:[#allocation8 + $0x48] sm:$0xff]
    %v1297 = vld [vmem:[#allocation8 + $0x50] sm:$0xff]
    %v1298 = vld [vmem:[#allocation8 + $0x58] sm:$0xff]
    %v1299 = vld [vmem:[#allocation8 + $0x60] sm:$0xff]
    %v1300 = vld [vmem:[#allocation8 + $0x68] sm:$0xff]
    %v1301 = vld [vmem:[#allocation8 + $0x70] sm:$0xff]
    %v1302 = vld [vmem:[#allocation8 + $0x78] sm:$0xff]
    %v1303 = vld [vmem:[%s15] sm:$0x1]
    %v1305 = vperm.slane %v1303, 0
    %1307 = vmatpush.msra.mxu0 %v1302
    %1308 = vmatpush.msra.mxu0 %v1301
    %1309 = vmatpush.msra.mxu0 %v1300
    %1310 = vmatpush.msra.mxu0 %v1299
    %1311 = vmatpush.msra.mxu0 %v1298
    %1312 = vmatpush.msra.mxu0 %v1297
    %1313 = vmatpush.msra.mxu0 %v1296
    %1314 = vmatpush.msra.mxu0 %v1295
    %1315 = vmatpush.msra.mxu0 %v1294
    %1316 = vmatpush.msra.mxu0 %v1293
    %1317 = vmatpush.msra.mxu0 %v1292
    %1318 = vmatpush.msra.mxu0 %v1291
    %1319 = vmatpush.msra.mxu0 %v1290
    %1320 = vmatpush.msra.mxu0 %v1289
    %1321 = vmatpush.msra.mxu0 %v1288
    %1322 = vmatpush.msra.mxu0 %v1287
    %1323 = vmatmul.f32.gmra.mxu0 %v1285
    %v1324 = vpop.f32.mrf.mxu0
    %v1325 = vadd.f32 %v1305, %v1324
    %1326 = vmatmul.f32.gmra.mxu0 %v1286
    %v1327 = vpop.f32.mrf.mxu0
    %v1328 = vadd.f32 %v1305, %v1327
    %1329 = vdwg.mxu0
    %1330 = vadd.xlane.f32.xlu0 %v1325
    %v1331 = vpop.xlane.xlu0 %1330
    %1332 = vadd.xlane.f32.xlu0 %v1328
    %v1333 = vpop.xlane.xlu0 %1332
    %v1334 = vrcp.pop 128.0
    %v1335 = vmul.f32 128.0, %v1334
    %v1336 = vsub.f32 1.0, %v1335
    %v1337 = vmul.f32 %v1334, %v1336
    %v1338 = vadd.f32 %v1334, %v1337
    %vm1339 = vweird.f32 %v1334
    %v1340 = vsel %vm1339, %v1334, %v1338
    %v1341 = vmul.f32 %v1331, %v1340
    %v1342 = vmul.f32 %v1333, %v1340
    %v1343 = vmul.f32 %v1325, %v1325
    %v1344 = vmul.f32 %v1328, %v1328
    %1345 = vadd.xlane.f32.xlu0 %v1343
    %v1346 = vpop.xlane.xlu0 %1345
    %1347 = vadd.xlane.f32.xlu0 %v1344
    %v1348 = vpop.xlane.xlu0 %1347
    %v1349 = vmul.f32 %v1346, %v1340
    %v1350 = vmul.f32 %v1348, %v1340
    %v1351 = vmul.f32 %v1341, %v1341
    %v1352 = vmul.f32 %v1342, %v1342
    %v1353 = vsub.f32 %v1349, %v1351
    %v1354 = vsub.f32 %v1350, %v1352
    %v1355 = vsub.f32 %v1325, %v1341
    %v1356 = vsub.f32 %v1328, %v1342
    %v1357 = vadd.f32 %v1353, 1e-05
    %v1358 = vadd.f32 %v1354, 1e-05
    %v1359 = vrsqrt.pop %v1357
    %v1360 = vmul.f32 %v1359, %v1357
    %v1361 = vmul.f32 %v1360, %v1359
    %v1362 = vmul.f32 0.5, %v1361
    %v1363 = vsub.f32 1.5, %v1362
    %v1364 = vmul.f32 %v1359, %v1363
    %vm1365 = vweird.f32 %v1357
    %vm1366 = vweird.f32 %v1359
    %vm1367 = vmor %vm1365, %vm1366
    %v1368 = vsel %vm1367, %v1359, %v1364
    %v1369 = vrsqrt.pop %v1358
    %v1370 = vmul.f32 %v1369, %v1358
    %v1371 = vmul.f32 %v1370, %v1369
    %v1372 = vmul.f32 0.5, %v1371
    %v1373 = vsub.f32 1.5, %v1372
    %v1374 = vmul.f32 %v1369, %v1373
    %vm1375 = vweird.f32 %v1358
    %vm1376 = vweird.f32 %v1369
    %vm1377 = vmor %vm1375, %vm1376
    %v1378 = vsel %vm1377, %v1369, %v1374
    %v1379 = vmul.f32 %v1355, %v1368
    %v1380 = vmul.f32 %v1356, %v1378
    %v1381 = vld [vmem:[%s16] sm:$0x1]
    %v1383 = vperm.slane %v1381, 0
    %v1385 = vmul.f32 %v1379, %v1383
    %v1386 = vmul.f32 %v1380, %v1383
    %v1387 = vld [vmem:[%s17] sm:$0x1]
    %v1389 = vperm.slane %v1387, 0
    %v1391 = vadd.f32 %v1385, %v1389
    %v1392 = vadd.f32 %v1386, %v1389
    %v1393 = vmul.f32 %v1391, 0.5
    %v1394 = vmul.f32 %v1392, 0.5
    %v1395 = vmul.f32 %v1391, 0.70710677
    %v1396 = vmul.f32 %v1392, 0.70710677
    %v1397 = vmul.f32 %v1395, %v1395
    %v1398 = vmin.f32 16.0, %v1397
    %v1399 = vmul.f32 %v1398, 2.1237322e-06
    %v1400 = vadd.f32 %v1399, 0.00028619796
    %v1401 = vmul.f32 %v1398, %v1400
    %v1402 = vadd.f32 %v1401, 0.0036580483
    %v1403 = vmul.f32 %v1398, %v1402
    %v1404 = vadd.f32 %v1403, 0.05243302
    %v1405 = vmul.f32 %v1398, %v1404
    %v1406 = vadd.f32 %v1405, 0.18741608
    %v1407 = vmul.f32 %v1398, %v1406
    %v1408 = vadd.f32 %v1407, 1.1283791
    %v1409 = vmul.f32 %v1395, %v1408
    %v1410 = vmul.f32 %v1398, 3.8918573e-05
    %v1411 = vadd.f32 %v1410, 0.001143296
    %v1412 = vmul.f32 %v1398, %v1411
    %v1413 = vadd.f32 %v1412, 0.014752088
    %v1414 = vmul.f32 %v1398, %v1413
    %v1415 = vadd.f32 %v1414, 0.112945676
    %v1416 = vmul.f32 %v1398, %v1415
    %v1417 = vadd.f32 %v1416, 0.4994258
    %v1418 = vmul.f32 %v1398, %v1417
    %v1419 = vadd.f32 %v1418, 1.0
    %v1420 = vrcp.pop %v1419
    %v1421 = vmul.f32 %v1419, %v1420
    %v1422 = vsub.f32 1.0, %v1421
    %v1423 = vmul.f32 %v1420, %v1422
    %v1424 = vadd.f32 %v1420, %v1423
    %vm1425 = vweird.f32 %v1419
    %vm1426 = vweird.f32 %v1420
    %vm1427 = vmor %vm1425, %vm1426
    %v1428 = vsel %vm1427, %v1420, %v1424
    %v1429 = vand.u32 2147483647, %v1419
    %vm1430 = vcmp.eq.f32.partialorder %v1429, 8.507059e+37
    %v1431 = vand.u32 %v1419, 2147483648
    %v1432 = vor.u32 1.1754944e-38, %v1431
    %v1433 = vsel %vm1430, %v1432, %v1428
    %v1434 = vmul.f32 %v1409, %v1433
    %v1435 = vmin.f32 %v1434, 1.0
    %v1436 = vmax.f32 %v1435, -1.0
    %v1437 = vmul.f32 %v1396, %v1396
    %v1438 = vmin.f32 16.0, %v1437
    %v1439 = vmul.f32 %v1438, 2.1237322e-06
    %v1440 = vadd.f32 %v1439, 0.00028619796
    %v1441 = vmul.f32 %v1438, %v1440
    %v1442 = vadd.f32 %v1441, 0.0036580483
    %v1443 = vmul.f32 %v1438, %v1442
    %v1444 = vadd.f32 %v1443, 0.05243302
    %v1445 = vmul.f32 %v1438, %v1444
    %v1446 = vadd.f32 %v1445, 0.18741608
    %v1447 = vmul.f32 %v1438, %v1446
    %v1448 = vadd.f32 %v1447, 1.1283791
    %v1449 = vmul.f32 %v1396, %v1448
    %v1450 = vmul.f32 %v1438, 3.8918573e-05
    %v1451 = vadd.f32 %v1450, 0.001143296
    %v1452 = vmul.f32 %v1438, %v1451
    %v1453 = vadd.f32 %v1452, 0.014752088
    %v1454 = vmul.f32 %v1438, %v1453
    %v1455 = vadd.f32 %v1454, 0.112945676
    %v1456 = vmul.f32 %v1438, %v1455
    %v1457 = vadd.f32 %v1456, 0.4994258
    %v1458 = vmul.f32 %v1438, %v1457
    %v1459 = vadd.f32 %v1458, 1.0
    %v1460 = vrcp.pop %v1459
    %v1461 = vmul.f32 %v1459, %v1460
    %v1462 = vsub.f32 1.0, %v1461
    %v1463 = vmul.f32 %v1460, %v1462
    %v1464 = vadd.f32 %v1460, %v1463
    %vm1465 = vweird.f32 %v1459
    %vm1466 = vweird.f32 %v1460
    %vm1467 = vmor %vm1465, %vm1466
    %v1468 = vsel %vm1467, %v1460, %v1464
    %v1469 = vand.u32 2147483647, %v1459
    %vm1470 = vcmp.eq.f32.partialorder %v1469, 8.507059e+37
    %v1471 = vand.u32 %v1459, 2147483648
    %v1472 = vor.u32 1.1754944e-38, %v1471
    %v1473 = vsel %vm1470, %v1472, %v1468
    %v1474 = vmul.f32 %v1449, %v1473
    %v1475 = vmin.f32 %v1474, 1.0
    %v1476 = vmax.f32 %v1475, -1.0
    %v1477 = vadd.f32 %v1436, 1.0
    %v1478 = vadd.f32 %v1476, 1.0
    %v1479 = vmul.f32 %v1393, %v1477
    %v1480 = vmul.f32 %v1394, %v1478
    %v1481 = vld [vmem:[%s18] sm:$0xff]
    %v1482 = vld [vmem:[%s18 + $0x8] sm:$0xff]
    %v1483 = vld [vmem:[%s18 + $0x10] sm:$0xff]
    %v1484 = vld [vmem:[%s18 + $0x18] sm:$0xff]
    %v1485 = vld [vmem:[%s18 + $0x20] sm:$0xff]
    %v1486 = vld [vmem:[%s18 + $0x28] sm:$0xff]
    %v1487 = vld [vmem:[%s18 + $0x30] sm:$0xff]
    %v1488 = vld [vmem:[%s18 + $0x38] sm:$0xff]
    %v1489 = vld [vmem:[%s18 + $0x40] sm:$0xff]
    %v1490 = vld [vmem:[%s18 + $0x48] sm:$0xff]
    %v1491 = vld [vmem:[%s18 + $0x50] sm:$0xff]
    %v1492 = vld [vmem:[%s18 + $0x58] sm:$0xff]
    %v1493 = vld [vmem:[%s18 + $0x60] sm:$0xff]
    %v1494 = vld [vmem:[%s18 + $0x68] sm:$0xff]
    %v1495 = vld [vmem:[%s18 + $0x70] sm:$0xff]
    %v1496 = vld [vmem:[%s18 + $0x78] sm:$0xff]
    %v1497 = vld [vmem:[%s19] sm:$0x1]
    %v1499 = vperm.slane %v1497, 0
    %1501 = vmatpush.msra.mxu0 %v1496
    %1502 = vmatpush.msra.mxu0 %v1495
    %1503 = vmatpush.msra.mxu0 %v1494
    %1504 = vmatpush.msra.mxu0 %v1493
    %1505 = vmatpush.msra.mxu0 %v1492
    %1506 = vmatpush.msra.mxu0 %v1491
    %1507 = vmatpush.msra.mxu0 %v1490
    %1508 = vmatpush.msra.mxu0 %v1489
    %1509 = vmatpush.msra.mxu0 %v1488
    %1510 = vmatpush.msra.mxu0 %v1487
    %1511 = vmatpush.msra.mxu0 %v1486
    %1512 = vmatpush.msra.mxu0 %v1485
    %1513 = vmatpush.msra.mxu0 %v1484
    %1514 = vmatpush.msra.mxu0 %v1483
    %1515 = vmatpush.msra.mxu0 %v1482
    %1516 = vmatpush.msra.mxu0 %v1481
    %1517 = vmatmul.f32.gmra.mxu0 %v1479
    %v1518 = vpop.f32.mrf.mxu0
    %v1519 = vadd.f32 %v1499, %v1518
    %1520 = vmatmul.f32.gmra.mxu0 %v1480
    %v1521 = vpop.f32.mrf.mxu0
    %v1522 = vadd.f32 %v1499, %v1521
    %1523 = vdwg.mxu0
    %1524 = vst.msk [vmem:[#allocation10] sm:$0xff] %vm819, %v1519
    %1525 = vst.msk [vmem:[#allocation10 + $0x8] sm:$0xff] %vm819, %v1522
    // Predicated region
    $region98: #{tpu_custom_call.1} parent=1 // pred_check
      _
    $region99: #{tpu_custom_call.1} parent=1 // pred_check_branch
      %1527 = sbr.rel (0) target = $region101
    $region100: #{tpu_custom_call.1} parent=1 // pred_region
      %1529 = vsyncadd [#allocation4], 0
      %s1530 = sshll.u32 [#allocation10], 4
      %s1531 = int_to_ptr.vmem [resolvable:$true] %s1530
      %s1532 = sshll.u32 %s20, 4
      %s1533 = int_to_ptr.hbm [resolvable:$true] %s1532
      %1538 = dma.vmem_to_hbm [thread:$0]  %s1531, 256, %s1533, [#allocation4], 128, 128, 8
    $region101: #{tpu_custom_call.1} parent=1 // pred_fallthru
      _
    // Predicated region
    $region102: #{tpu_custom_call.1} parent=1 // pred_check
      _
    $region103: #{tpu_custom_call.1} parent=1 // pred_check_branch
      %1540 = sbr.rel (0) target = $region105
    $region104: #{tpu_custom_call.1} parent=1 // pred_region
      %1542 = dma.done [#allocation4], 256
    $region105: #{tpu_custom_call.1} parent=1 // pred_fallthru
      _
    %1543 = vsyncpa [#allocation3], 1
    %1544 = vsyncpa [#allocation6], 1
    %1545 = vsyncpa [#allocation9], 1
    %1546 = vsyncpa [#allocation4], 1

</llo_original>
